<compile_context>
chip_gen: v5e
topology: v5e:2x2
jax: 0.10.0
libtpu: 0.0.40
codegen_flags: <defaults>
</compile_context>

<pallas_src>
import math

import jax
import jax.numpy as jnp
import numpy as np
from jax import lax
from jax.experimental import pallas as pl
from jax.experimental.pallas import tpu as pltpu

# ----- module hyper-parameters (head_dim is hard-coded to 64 in the module) -----
NUM_HEADS = 8
HEAD_DIM = 64
SCALE = HEAD_DIM ** (-0.5)


def _attention_kernel(x_ref, wqkv_ref, wp_ref, bp_ref, o_ref):
    """One batch element: fused qkv projection, all heads, fused output projection."""
    H, D = NUM_HEADS, HEAD_DIM
    HD = H * D

    x = x_ref[0]                                   # (N, C)

    # Fused qkv projection: one lane-dense MXU matmul, K=C, output width 3*H*D=1536.
    # (qkv_bias=False in the module defaults.)
    qkv = jnp.dot(x, wqkv_ref[...], preferred_element_type=jnp.float32)   # (N, 3*H*D)

    # Per-head attention, statically unrolled over H=8 heads (no grid reduction).
    av_heads = []
    for h in range(H):
        q_h = qkv[:, 0 * HD + h * D: 0 * HD + (h + 1) * D]   # (N, D)
        k_h = qkv[:, 1 * HD + h * D: 1 * HD + (h + 1) * D]   # (N, D)
        v_h = qkv[:, 2 * HD + h * D: 2 * HD + (h + 1) * D]   # (N, D)

        # q @ k^T without materializing a transpose: contract the D axis of both.
        s = lax.dot_general(q_h, k_h, (((1,), (1,)), ((), ())),
                            preferred_element_type=jnp.float32) * SCALE   # (N, N)

        # softmax(dim=-1), all in f32 (matches torch.softmax); denom recip on the EUP.
        s = s - jnp.max(s, axis=-1, keepdims=True)
        p = jnp.exp(s)
        p = p * pl.reciprocal(jnp.sum(p, axis=-1, keepdims=True), approx=True)

        av_heads.append(jnp.dot(p, v_h, preferred_element_type=jnp.float32))  # (N, D)

    # Concatenate heads -> (N, H*D=512) and do a single output projection + bias.
    av = jnp.concatenate(av_heads, axis=-1)                                   # (N, H*D)
    out = jnp.dot(av, wp_ref[...], preferred_element_type=jnp.float32)        # (N, C)
    out = out + bp_ref[...]                                                   # bias broadcast

    o_ref[...] = out[None, :, :].astype(o_ref.dtype)


def attention_forward(x, w_qkv, w_proj, b_proj):
    """x: (B, N, C) f32.  w_qkv: (3*H*D, C).  w_proj: (C, H*D).  b_proj: (C,)."""
    B, N, C = x.shape
    H, D = NUM_HEADS, HEAD_DIM
    HD = H * D

    # ---- glue: transpose weights to "x @ W^T" layout (no compute) ----
    wqkv_t = w_qkv.T               # (C, 3*H*D)
    wp = w_proj.T                  # (H*D, C)
    bp = b_proj.reshape(1, C)      # (1, C)

    grid_spec = pltpu.PrefetchScalarGridSpec(
        num_scalar_prefetch=0,
        grid=(B,),
        in_specs=[
            pl.BlockSpec((1, N, C), lambda b: (b, 0, 0)),        # x: one batch per step
            # Weights: constant index maps -> fetched once, resident in VMEM.
            pl.BlockSpec((C, 3 * HD), lambda b: (0, 0)),          # fused W_qkv
            pl.BlockSpec((HD, C), lambda b: (0, 0)),              # W_proj
            pl.BlockSpec((1, C), lambda b: (0, 0)),               # b_proj
        ],
        out_specs=pl.BlockSpec((1, N, C), lambda b: (b, 0, 0)),
    )

    return pl.pallas_call(
        _attention_kernel,
        out_shape=jax.ShapeDtypeStruct((B, N, C), jnp.float32),
        grid_spec=grid_spec,
        compiler_params=pltpu.CompilerParams(
            dimension_semantics=("parallel",)),   # whole grid parallel (v7x megacore)
    )(x, wqkv_t, wp, bp)


def attention_reference(x, w_qkv, w_proj, b_proj):
    """Pure-JAX replica of the PyTorch forward, for verification."""
    B, N, C = x.shape
    H, D = NUM_HEADS, HEAD_DIM
    qkv = x @ w_qkv.T                                           # (B, N, 3*H*D)
    qkv = qkv.reshape(B, N, 3, H, D).transpose(2, 0, 3, 1, 4)   # (3, B, H, N, D)
    q, k, v = qkv[0], qkv[1], qkv[2]
    attn = (q @ jnp.swapaxes(k, -2, -1)) * SCALE
    attn = jax.nn.softmax(attn, axis=-1)
    out = (attn @ v).transpose(0, 2, 1, 3).reshape(B, N, H * D)
    return out @ w_proj.T + b_proj


if __name__ == "__main__":
    # Small shapes consistent with the module: num_patches=7, num_tokens=1 -> N=8; dim=32.
    B, N, C = 2, 8, 32
    H, D = NUM_HEADS, HEAD_DIM

    key = jax.random.PRNGKey(0)
    kx, kqkv, kproj, kb = jax.random.split(key, 4)

    x = jax.random.normal(kx, (B, N, C), dtype=jnp.float32)
    # nn.Linear(dim, 3*H*D, bias=False): weight (3*H*D, dim)
    w_qkv = jax.random.normal(kqkv, (3 * H * D, C), dtype=jnp.float32) * (1.0 / math.sqrt(C))
    # nn.Linear(H*D, dim): weight (dim, H*D), bias (dim,)
    w_proj = jax.random.normal(kproj, (C, H * D), dtype=jnp.float32) * (1.0 / math.sqrt(H * D))
    b_proj = jax.random.normal(kb, (C,), dtype=jnp.float32) * 0.01

    out = attention_forward(x, w_qkv, w_proj, b_proj)
    out = jax.block_until_ready(out)

    ref = attention_reference(x, w_qkv, w_proj, b_proj)
    # Tolerance loosened slightly to cover the EUP approximate-reciprocal softmax denom.
    np.testing.assert_allclose(np.asarray(out), np.asarray(ref), rtol=2e-2, atol=2e-2)

    print("KERNEL_OK")
</pallas_src>

<mosaic_0001>
module attributes {stable_mosaic.version = 11 : i64} {
  func.func @_attention_kernel(%arg0: i32, %arg1: memref<1x8x32xf32, #tpu.memory_space<vmem>>, %arg2: memref<32x1536xf32, #tpu.memory_space<vmem>>, %arg3: memref<512x32xf32, #tpu.memory_space<vmem>>, %arg4: memref<1x32xf32, #tpu.memory_space<vmem>>, %arg5: memref<1x8x32xf32, #tpu.memory_space<vmem>>) attributes {dimension_semantics = [#tpu.dimension_semantics<parallel>], iteration_bounds = array<i64: 2>, scalar_prefetch = 0 : i64, scratch_operands = 0 : i64, tpu.core_type = #tpu.core_type<tc>, window_params = [{transform_indices = @transform_0, window_bounds = array<i64: 1, 8, 32>}, {pipeline_mode = #tpu.pipeline_mode<synchronous>, transform_indices = @transform_1, window_bounds = array<i64: 32, 1536>}, {pipeline_mode = #tpu.pipeline_mode<synchronous>, transform_indices = @transform_2, window_bounds = array<i64: 512, 32>}, {pipeline_mode = #tpu.pipeline_mode<synchronous>, transform_indices = @transform_3, window_bounds = array<i64: 1, 32>}, {transform_indices = @transform_4, window_bounds = array<i64: 1, 8, 32>}]} {
    %c0 = arith.constant 0 : index
    %c0_0 = arith.constant 0 : index
    %c0_1 = arith.constant 0 : index
    %0 = vector.load %arg1[%c0, %c0_0, %c0_1] : memref<1x8x32xf32, #tpu.memory_space<vmem>>, vector<1x8x32xf32>
    %1 = vector.shape_cast %0 : vector<1x8x32xf32> to vector<8x32xf32>
    %c0_2 = arith.constant 0 : index
    %c0_3 = arith.constant 0 : index
    %2 = vector.load %arg2[%c0_2, %c0_3] : memref<32x1536xf32, #tpu.memory_space<vmem>>, vector<32x1536xf32>
    %cst = arith.constant dense<0.000000e+00> : vector<8x1536xf32>
    %3 = tpu.matmul %1, %2, %cst {dimension_numbers = #tpu.dot_dimension_numbers<[1], [0], [0], [1], [0, 0, 1, 1], [], []>} : vector<8x32xf32>, vector<32x1536xf32>, vector<8x1536xf32> -> vector<8x1536xf32>
    %4 = vector.extract_strided_slice %3 {offsets = [0, 0], sizes = [8, 64], strides = [1, 1]} : vector<8x1536xf32> to vector<8x64xf32>
    %5 = vector.extract_strided_slice %3 {offsets = [0, 512], sizes = [8, 64], strides = [1, 1]} : vector<8x1536xf32> to vector<8x64xf32>
    %6 = vector.extract_strided_slice %3 {offsets = [0, 1024], sizes = [8, 64], strides = [1, 1]} : vector<8x1536xf32> to vector<8x64xf32>
    %cst_4 = arith.constant dense<0.000000e+00> : vector<8x8xf32>
    %7 = tpu.matmul %4, %5, %cst_4 {dimension_numbers = #tpu.dot_dimension_numbers<[1], [1], [0], [0], [0, 0, 1, 0], [], []>} : vector<8x64xf32>, vector<8x64xf32>, vector<8x8xf32> -> vector<8x8xf32>
    %cst_5 = arith.constant 1.250000e-01 : f32
    %8 = vector.broadcast %cst_5 : f32 to vector<8x8xf32>
    %9 = arith.mulf %7, %8 : vector<8x8xf32>
    %cst_6 = arith.constant dense<0xFF800000> : vector<8xf32>
    %10 = vector.multi_reduction <maximumf>, %9, %cst_6 [1] : vector<8x8xf32> to vector<8xf32>
    %11 = vector.shape_cast %10 : vector<8xf32> to vector<8x1xf32>
    %12 = vector.broadcast %11 : vector<8x1xf32> to vector<8x8xf32>
    %13 = arith.subf %9, %12 : vector<8x8xf32>
    %14 = math.exp %13 : vector<8x8xf32>
    %cst_7 = arith.constant dense<0.000000e+00> : vector<8xf32>
    %15 = vector.multi_reduction <add>, %14, %cst_7 [1] : vector<8x8xf32> to vector<8xf32>
    %16 = vector.shape_cast %15 : vector<8xf32> to vector<8x1xf32>
    %17 = tpu.reciprocal %16 {approx = true} : vector<8x1xf32> -> vector<8x1xf32>
    %18 = vector.broadcast %17 : vector<8x1xf32> to vector<8x8xf32>
    %19 = arith.mulf %14, %18 : vector<8x8xf32>
    %cst_8 = arith.constant dense<0.000000e+00> : vector<8x64xf32>
    %20 = tpu.matmul %19, %6, %cst_8 {dimension_numbers = #tpu.dot_dimension_numbers<[1], [0], [0], [1], [0, 0, 1, 1], [], []>} : vector<8x8xf32>, vector<8x64xf32>, vector<8x64xf32> -> vector<8x64xf32>
    %21 = vector.extract_strided_slice %3 {offsets = [0, 64], sizes = [8, 64], strides = [1, 1]} : vector<8x1536xf32> to vector<8x64xf32>
    %22 = vector.extract_strided_slice %3 {offsets = [0, 576], sizes = [8, 64], strides = [1, 1]} : vector<8x1536xf32> to vector<8x64xf32>
    %23 = vector.extract_strided_slice %3 {offsets = [0, 1088], sizes = [8, 64], strides = [1, 1]} : vector<8x1536xf32> to vector<8x64xf32>
    %cst_9 = arith.constant dense<0.000000e+00> : vector<8x8xf32>
    %24 = tpu.matmul %21, %22, %cst_9 {dimension_numbers = #tpu.dot_dimension_numbers<[1], [1], [0], [0], [0, 0, 1, 0], [], []>} : vector<8x64xf32>, vector<8x64xf32>, vector<8x8xf32> -> vector<8x8xf32>
    %cst_10 = arith.constant 1.250000e-01 : f32
    %25 = vector.broadcast %cst_10 : f32 to vector<8x8xf32>
    %26 = arith.mulf %24, %25 : vector<8x8xf32>
    %cst_11 = arith.constant dense<0xFF800000> : vector<8xf32>
    %27 = vector.multi_reduction <maximumf>, %26, %cst_11 [1] : vector<8x8xf32> to vector<8xf32>
    %28 = vector.shape_cast %27 : vector<8xf32> to vector<8x1xf32>
    %29 = vector.broadcast %28 : vector<8x1xf32> to vector<8x8xf32>
    %30 = arith.subf %26, %29 : vector<8x8xf32>
    %31 = math.exp %30 : vector<8x8xf32>
    %cst_12 = arith.constant dense<0.000000e+00> : vector<8xf32>
    %32 = vector.multi_reduction <add>, %31, %cst_12 [1] : vector<8x8xf32> to vector<8xf32>
    %33 = vector.shape_cast %32 : vector<8xf32> to vector<8x1xf32>
    %34 = tpu.reciprocal %33 {approx = true} : vector<8x1xf32> -> vector<8x1xf32>
    %35 = vector.broadcast %34 : vector<8x1xf32> to vector<8x8xf32>
    %36 = arith.mulf %31, %35 : vector<8x8xf32>
    %cst_13 = arith.constant dense<0.000000e+00> : vector<8x64xf32>
    %37 = tpu.matmul %36, %23, %cst_13 {dimension_numbers = #tpu.dot_dimension_numbers<[1], [0], [0], [1], [0, 0, 1, 1], [], []>} : vector<8x8xf32>, vector<8x64xf32>, vector<8x64xf32> -> vector<8x64xf32>
    %38 = vector.extract_strided_slice %3 {offsets = [0, 128], sizes = [8, 64], strides = [1, 1]} : vector<8x1536xf32> to vector<8x64xf32>
    %39 = vector.extract_strided_slice %3 {offsets = [0, 640], sizes = [8, 64], strides = [1, 1]} : vector<8x1536xf32> to vector<8x64xf32>
    %40 = vector.extract_strided_slice %3 {offsets = [0, 1152], sizes = [8, 64], strides = [1, 1]} : vector<8x1536xf32> to vector<8x64xf32>
    %cst_14 = arith.constant dense<0.000000e+00> : vector<8x8xf32>
    %41 = tpu.matmul %38, %39, %cst_14 {dimension_numbers = #tpu.dot_dimension_numbers<[1], [1], [0], [0], [0, 0, 1, 0], [], []>} : vector<8x64xf32>, vector<8x64xf32>, vector<8x8xf32> -> vector<8x8xf32>
    %cst_15 = arith.constant 1.250000e-01 : f32
    %42 = vector.broadcast %cst_15 : f32 to vector<8x8xf32>
    %43 = arith.mulf %41, %42 : vector<8x8xf32>
    %cst_16 = arith.constant dense<0xFF800000> : vector<8xf32>
    %44 = vector.multi_reduction <maximumf>, %43, %cst_16 [1] : vector<8x8xf32> to vector<8xf32>
    %45 = vector.shape_cast %44 : vector<8xf32> to vector<8x1xf32>
    %46 = vector.broadcast %45 : vector<8x1xf32> to vector<8x8xf32>
    %47 = arith.subf %43, %46 : vector<8x8xf32>
    %48 = math.exp %47 : vector<8x8xf32>
    %cst_17 = arith.constant dense<0.000000e+00> : vector<8xf32>
    %49 = vector.multi_reduction <add>, %48, %cst_17 [1] : vector<8x8xf32> to vector<8xf32>
    %50 = vector.shape_cast %49 : vector<8xf32> to vector<8x1xf32>
    %51 = tpu.reciprocal %50 {approx = true} : vector<8x1xf32> -> vector<8x1xf32>
    %52 = vector.broadcast %51 : vector<8x1xf32> to vector<8x8xf32>
    %53 = arith.mulf %48, %52 : vector<8x8xf32>
    %cst_18 = arith.constant dense<0.000000e+00> : vector<8x64xf32>
    %54 = tpu.matmul %53, %40, %cst_18 {dimension_numbers = #tpu.dot_dimension_numbers<[1], [0], [0], [1], [0, 0, 1, 1], [], []>} : vector<8x8xf32>, vector<8x64xf32>, vector<8x64xf32> -> vector<8x64xf32>
    %55 = vector.extract_strided_slice %3 {offsets = [0, 192], sizes = [8, 64], strides = [1, 1]} : vector<8x1536xf32> to vector<8x64xf32>
    %56 = vector.extract_strided_slice %3 {offsets = [0, 704], sizes = [8, 64], strides = [1, 1]} : vector<8x1536xf32> to vector<8x64xf32>
    %57 = vector.extract_strided_slice %3 {offsets = [0, 1216], sizes = [8, 64], strides = [1, 1]} : vector<8x1536xf32> to vector<8x64xf32>
    %cst_19 = arith.constant dense<0.000000e+00> : vector<8x8xf32>
    %58 = tpu.matmul %55, %56, %cst_19 {dimension_numbers = #tpu.dot_dimension_numbers<[1], [1], [0], [0], [0, 0, 1, 0], [], []>} : vector<8x64xf32>, vector<8x64xf32>, vector<8x8xf32> -> vector<8x8xf32>
    %cst_20 = arith.constant 1.250000e-01 : f32
    %59 = vector.broadcast %cst_20 : f32 to vector<8x8xf32>
    %60 = arith.mulf %58, %59 : vector<8x8xf32>
    %cst_21 = arith.constant dense<0xFF800000> : vector<8xf32>
    %61 = vector.multi_reduction <maximumf>, %60, %cst_21 [1] : vector<8x8xf32> to vector<8xf32>
    %62 = vector.shape_cast %61 : vector<8xf32> to vector<8x1xf32>
    %63 = vector.broadcast %62 : vector<8x1xf32> to vector<8x8xf32>
    %64 = arith.subf %60, %63 : vector<8x8xf32>
    %65 = math.exp %64 : vector<8x8xf32>
    %cst_22 = arith.constant dense<0.000000e+00> : vector<8xf32>
    %66 = vector.multi_reduction <add>, %65, %cst_22 [1] : vector<8x8xf32> to vector<8xf32>
    %67 = vector.shape_cast %66 : vector<8xf32> to vector<8x1xf32>
    %68 = tpu.reciprocal %67 {approx = true} : vector<8x1xf32> -> vector<8x1xf32>
    %69 = vector.broadcast %68 : vector<8x1xf32> to vector<8x8xf32>
    %70 = arith.mulf %65, %69 : vector<8x8xf32>
    %cst_23 = arith.constant dense<0.000000e+00> : vector<8x64xf32>
    %71 = tpu.matmul %70, %57, %cst_23 {dimension_numbers = #tpu.dot_dimension_numbers<[1], [0], [0], [1], [0, 0, 1, 1], [], []>} : vector<8x8xf32>, vector<8x64xf32>, vector<8x64xf32> -> vector<8x64xf32>
    %72 = vector.extract_strided_slice %3 {offsets = [0, 256], sizes = [8, 64], strides = [1, 1]} : vector<8x1536xf32> to vector<8x64xf32>
    %73 = vector.extract_strided_slice %3 {offsets = [0, 768], sizes = [8, 64], strides = [1, 1]} : vector<8x1536xf32> to vector<8x64xf32>
    %74 = vector.extract_strided_slice %3 {offsets = [0, 1280], sizes = [8, 64], strides = [1, 1]} : vector<8x1536xf32> to vector<8x64xf32>
    %cst_24 = arith.constant dense<0.000000e+00> : vector<8x8xf32>
    %75 = tpu.matmul %72, %73, %cst_24 {dimension_numbers = #tpu.dot_dimension_numbers<[1], [1], [0], [0], [0, 0, 1, 0], [], []>} : vector<8x64xf32>, vector<8x64xf32>, vector<8x8xf32> -> vector<8x8xf32>
    %cst_25 = arith.constant 1.250000e-01 : f32
    %76 = vector.broadcast %cst_25 : f32 to vector<8x8xf32>
    %77 = arith.mulf %75, %76 : vector<8x8xf32>
    %cst_26 = arith.constant dense<0xFF800000> : vector<8xf32>
    %78 = vector.multi_reduction <maximumf>, %77, %cst_26 [1] : vector<8x8xf32> to vector<8xf32>
    %79 = vector.shape_cast %78 : vector<8xf32> to vector<8x1xf32>
    %80 = vector.broadcast %79 : vector<8x1xf32> to vector<8x8xf32>
    %81 = arith.subf %77, %80 : vector<8x8xf32>
    %82 = math.exp %81 : vector<8x8xf32>
    %cst_27 = arith.constant dense<0.000000e+00> : vector<8xf32>
    %83 = vector.multi_reduction <add>, %82, %cst_27 [1] : vector<8x8xf32> to vector<8xf32>
    %84 = vector.shape_cast %83 : vector<8xf32> to vector<8x1xf32>
    %85 = tpu.reciprocal %84 {approx = true} : vector<8x1xf32> -> vector<8x1xf32>
    %86 = vector.broadcast %85 : vector<8x1xf32> to vector<8x8xf32>
    %87 = arith.mulf %82, %86 : vector<8x8xf32>
    %cst_28 = arith.constant dense<0.000000e+00> : vector<8x64xf32>
    %88 = tpu.matmul %87, %74, %cst_28 {dimension_numbers = #tpu.dot_dimension_numbers<[1], [0], [0], [1], [0, 0, 1, 1], [], []>} : vector<8x8xf32>, vector<8x64xf32>, vector<8x64xf32> -> vector<8x64xf32>
    %89 = vector.extract_strided_slice %3 {offsets = [0, 320], sizes = [8, 64], strides = [1, 1]} : vector<8x1536xf32> to vector<8x64xf32>
    %90 = vector.extract_strided_slice %3 {offsets = [0, 832], sizes = [8, 64], strides = [1, 1]} : vector<8x1536xf32> to vector<8x64xf32>
    %91 = vector.extract_strided_slice %3 {offsets = [0, 1344], sizes = [8, 64], strides = [1, 1]} : vector<8x1536xf32> to vector<8x64xf32>
    %cst_29 = arith.constant dense<0.000000e+00> : vector<8x8xf32>
    %92 = tpu.matmul %89, %90, %cst_29 {dimension_numbers = #tpu.dot_dimension_numbers<[1], [1], [0], [0], [0, 0, 1, 0], [], []>} : vector<8x64xf32>, vector<8x64xf32>, vector<8x8xf32> -> vector<8x8xf32>
    %cst_30 = arith.constant 1.250000e-01 : f32
    %93 = vector.broadcast %cst_30 : f32 to vector<8x8xf32>
    %94 = arith.mulf %92, %93 : vector<8x8xf32>
    %cst_31 = arith.constant dense<0xFF800000> : vector<8xf32>
    %95 = vector.multi_reduction <maximumf>, %94, %cst_31 [1] : vector<8x8xf32> to vector<8xf32>
    %96 = vector.shape_cast %95 : vector<8xf32> to vector<8x1xf32>
    %97 = vector.broadcast %96 : vector<8x1xf32> to vector<8x8xf32>
    %98 = arith.subf %94, %97 : vector<8x8xf32>
    %99 = math.exp %98 : vector<8x8xf32>
    %cst_32 = arith.constant dense<0.000000e+00> : vector<8xf32>
    %100 = vector.multi_reduction <add>, %99, %cst_32 [1] : vector<8x8xf32> to vector<8xf32>
    %101 = vector.shape_cast %100 : vector<8xf32> to vector<8x1xf32>
    %102 = tpu.reciprocal %101 {approx = true} : vector<8x1xf32> -> vector<8x1xf32>
    %103 = vector.broadcast %102 : vector<8x1xf32> to vector<8x8xf32>
    %104 = arith.mulf %99, %103 : vector<8x8xf32>
    %cst_33 = arith.constant dense<0.000000e+00> : vector<8x64xf32>
    %105 = tpu.matmul %104, %91, %cst_33 {dimension_numbers = #tpu.dot_dimension_numbers<[1], [0], [0], [1], [0, 0, 1, 1], [], []>} : vector<8x8xf32>, vector<8x64xf32>, vector<8x64xf32> -> vector<8x64xf32>
    %106 = vector.extract_strided_slice %3 {offsets = [0, 384], sizes = [8, 64], strides = [1, 1]} : vector<8x1536xf32> to vector<8x64xf32>
    %107 = vector.extract_strided_slice %3 {offsets = [0, 896], sizes = [8, 64], strides = [1, 1]} : vector<8x1536xf32> to vector<8x64xf32>
    %108 = vector.extract_strided_slice %3 {offsets = [0, 1408], sizes = [8, 64], strides = [1, 1]} : vector<8x1536xf32> to vector<8x64xf32>
    %cst_34 = arith.constant dense<0.000000e+00> : vector<8x8xf32>
    %109 = tpu.matmul %106, %107, %cst_34 {dimension_numbers = #tpu.dot_dimension_numbers<[1], [1], [0], [0], [0, 0, 1, 0], [], []>} : vector<8x64xf32>, vector<8x64xf32>, vector<8x8xf32> -> vector<8x8xf32>
    %cst_35 = arith.constant 1.250000e-01 : f32
    %110 = vector.broadcast %cst_35 : f32 to vector<8x8xf32>
    %111 = arith.mulf %109, %110 : vector<8x8xf32>
    %cst_36 = arith.constant dense<0xFF800000> : vector<8xf32>
    %112 = vector.multi_reduction <maximumf>, %111, %cst_36 [1] : vector<8x8xf32> to vector<8xf32>
    %113 = vector.shape_cast %112 : vector<8xf32> to vector<8x1xf32>
    %114 = vector.broadcast %113 : vector<8x1xf32> to vector<8x8xf32>
    %115 = arith.subf %111, %114 : vector<8x8xf32>
    %116 = math.exp %115 : vector<8x8xf32>
    %cst_37 = arith.constant dense<0.000000e+00> : vector<8xf32>
    %117 = vector.multi_reduction <add>, %116, %cst_37 [1] : vector<8x8xf32> to vector<8xf32>
    %118 = vector.shape_cast %117 : vector<8xf32> to vector<8x1xf32>
    %119 = tpu.reciprocal %118 {approx = true} : vector<8x1xf32> -> vector<8x1xf32>
    %120 = vector.broadcast %119 : vector<8x1xf32> to vector<8x8xf32>
    %121 = arith.mulf %116, %120 : vector<8x8xf32>
    %cst_38 = arith.constant dense<0.000000e+00> : vector<8x64xf32>
    %122 = tpu.matmul %121, %108, %cst_38 {dimension_numbers = #tpu.dot_dimension_numbers<[1], [0], [0], [1], [0, 0, 1, 1], [], []>} : vector<8x8xf32>, vector<8x64xf32>, vector<8x64xf32> -> vector<8x64xf32>
    %123 = vector.extract_strided_slice %3 {offsets = [0, 448], sizes = [8, 64], strides = [1, 1]} : vector<8x1536xf32> to vector<8x64xf32>
    %124 = vector.extract_strided_slice %3 {offsets = [0, 960], sizes = [8, 64], strides = [1, 1]} : vector<8x1536xf32> to vector<8x64xf32>
    %125 = vector.extract_strided_slice %3 {offsets = [0, 1472], sizes = [8, 64], strides = [1, 1]} : vector<8x1536xf32> to vector<8x64xf32>
    %cst_39 = arith.constant dense<0.000000e+00> : vector<8x8xf32>
    %126 = tpu.matmul %123, %124, %cst_39 {dimension_numbers = #tpu.dot_dimension_numbers<[1], [1], [0], [0], [0, 0, 1, 0], [], []>} : vector<8x64xf32>, vector<8x64xf32>, vector<8x8xf32> -> vector<8x8xf32>
    %cst_40 = arith.constant 1.250000e-01 : f32
    %127 = vector.broadcast %cst_40 : f32 to vector<8x8xf32>
    %128 = arith.mulf %126, %127 : vector<8x8xf32>
    %cst_41 = arith.constant dense<0xFF800000> : vector<8xf32>
    %129 = vector.multi_reduction <maximumf>, %128, %cst_41 [1] : vector<8x8xf32> to vector<8xf32>
    %130 = vector.shape_cast %129 : vector<8xf32> to vector<8x1xf32>
    %131 = vector.broadcast %130 : vector<8x1xf32> to vector<8x8xf32>
    %132 = arith.subf %128, %131 : vector<8x8xf32>
    %133 = math.exp %132 : vector<8x8xf32>
    %cst_42 = arith.constant dense<0.000000e+00> : vector<8xf32>
    %134 = vector.multi_reduction <add>, %133, %cst_42 [1] : vector<8x8xf32> to vector<8xf32>
    %135 = vector.shape_cast %134 : vector<8xf32> to vector<8x1xf32>
    %136 = tpu.reciprocal %135 {approx = true} : vector<8x1xf32> -> vector<8x1xf32>
    %137 = vector.broadcast %136 : vector<8x1xf32> to vector<8x8xf32>
    %138 = arith.mulf %133, %137 : vector<8x8xf32>
    %cst_43 = arith.constant dense<0.000000e+00> : vector<8x64xf32>
    %139 = tpu.matmul %138, %125, %cst_43 {dimension_numbers = #tpu.dot_dimension_numbers<[1], [0], [0], [1], [0, 0, 1, 1], [], []>} : vector<8x8xf32>, vector<8x64xf32>, vector<8x64xf32> -> vector<8x64xf32>
    %140 = tpu.concatenate %20, %37, %54, %71, %88, %105, %122, %139 in 1 : vector<8x64xf32>, vector<8x64xf32>, vector<8x64xf32>, vector<8x64xf32>, vector<8x64xf32>, vector<8x64xf32>, vector<8x64xf32>, vector<8x64xf32> -> vector<8x512xf32>
    %c0_44 = arith.constant 0 : index
    %c0_45 = arith.constant 0 : index
    %141 = vector.load %arg3[%c0_44, %c0_45] : memref<512x32xf32, #tpu.memory_space<vmem>>, vector<512x32xf32>
    %cst_46 = arith.constant dense<0.000000e+00> : vector<8x32xf32>
    %142 = tpu.matmul %140, %141, %cst_46 {dimension_numbers = #tpu.dot_dimension_numbers<[1], [0], [0], [1], [0, 0, 1, 1], [], []>} : vector<8x512xf32>, vector<512x32xf32>, vector<8x32xf32> -> vector<8x32xf32>
    %c0_47 = arith.constant 0 : index
    %c0_48 = arith.constant 0 : index
    %143 = vector.load %arg4[%c0_47, %c0_48] : memref<1x32xf32, #tpu.memory_space<vmem>>, vector<1x32xf32>
    %144 = vector.broadcast %143 : vector<1x32xf32> to vector<8x32xf32>
    %145 = arith.addf %142, %144 : vector<8x32xf32>
    %146 = vector.shape_cast %145 : vector<8x32xf32> to vector<1x8x32xf32>
    %c0_49 = arith.constant 0 : index
    %c0_50 = arith.constant 0 : index
    %c0_51 = arith.constant 0 : index
    %147 = vector.load %arg5[%c0_49, %c0_50, %c0_51] : memref<1x8x32xf32, #tpu.memory_space<vmem>>, vector<1x8x32xf32>
    tpu.vector_store %arg5[%c0_49, %c0_50, %c0_51], %146 {strides = array<i32>} : memref<1x8x32xf32, #tpu.memory_space<vmem>>, vector<1x8x32xf32>,
    return
  }
  func.func @transform_0(%arg0: i32) -> (i32, i32, i32) {
    %c0_i32 = arith.constant 0 : i32
    %c0_i32_0 = arith.constant 0 : i32
    %c0_i32_1 = arith.constant 0 : i32
    return %arg0, %c0_i32, %c0_i32_0 : i32, i32, i32
  }
  func.func @transform_1(%arg0: i32) -> (i32, i32) {
    %c0_i32 = arith.constant 0 : i32
    %c0_i32_0 = arith.constant 0 : i32
    %c0_i32_1 = arith.constant 0 : i32
    return %c0_i32, %c0_i32_0 : i32, i32
  }
  func.func @transform_2(%arg0: i32) -> (i32, i32) {
    %c0_i32 = arith.constant 0 : i32
    %c0_i32_0 = arith.constant 0 : i32
    %c0_i32_1 = arith.constant 0 : i32
    return %c0_i32, %c0_i32_0 : i32, i32
  }
  func.func @transform_3(%arg0: i32) -> (i32, i32) {
    %c0_i32 = arith.constant 0 : i32
    %c0_i32_0 = arith.constant 0 : i32
    %c0_i32_1 = arith.constant 0 : i32
    return %c0_i32, %c0_i32_0 : i32, i32
  }
  func.func @transform_4(%arg0: i32) -> (i32, i32, i32) {
    %c0_i32 = arith.constant 0 : i32
    %c0_i32_0 = arith.constant 0 : i32
    %c0_i32_1 = arith.constant 0 : i32
    return %arg0, %c0_i32, %c0_i32_0 : i32, i32, i32
  }
}

</mosaic_0001>

<llo_original>
// kernel: tpu_custom_call.1
$region0: #{tpu_custom_call.1}
  #allocation0 [shape = 'u32[]', space=smem, size = 0x4, offset = 0x4, fixed_abs, tag = 'smem constant byte address 0x4 - core index']
  #allocation1 [shape = 'u32[72,128]{1,0:T(1,128)}', space=vmem, size = 0x9000, scoped, tag = 'internal scratch']
  %s0 = inlined_call_operand.vmem [shape: f32[2,8,32], index: 0, kind: input, shape index: {}]
  %s1 = inlined_call_operand.vmem [shape: f32[32,1536], index: 1, kind: input, shape index: {}]
  %s2 = inlined_call_operand.vmem [shape: f32[512,32], index: 2, kind: input, shape index: {}]
  %s3 = inlined_call_operand.vmem [shape: f32[1,32], index: 3, kind: input, shape index: {}]
  %s4 = inlined_call_operand.hbm [shape: f32[2,8,32], index: 4, kind: output, shape index: {}]
  %s5 = sld [smem:[#allocation0]]
  $region49: #{tpu_custom_call.1} parent=0
    _
  %s7 = ssub.s32 1, %s5
  %s8 = scalar_select 0, %s7, %s5
  $region1: #{tpu_custom_call.1} parent=0
    #allocation2 [shape = 'u8[8192]{0}', space=vmem, size = 0x2000, scoped, tag = 'output window, operand 0']
    #allocation3 [shape = 's32[2]{0}', space=sflag, size = 0x8, scoped, tag = 'scoped memory for tpu_custom_call.1']
    %9 = vsyncpa [#allocation3], 0
    %s10 = scalar_lea.sflag [#allocation3], 1
    %11 = vsyncpa %s10, 0
    loop: start=0, step=1, limit=4
    $region2: #{tpu_custom_call.1} parent=1 // loop_pre_header
      _
    $region3: #{tpu_custom_call.1} parent=1 // loop_header
      %s13 = sphi 0, %s17
      %p14 = scmp.ge.s32.totalorder %s13, 4
      %s23 = sphi 0, %s25
      %s26 = sphi 0, %s23
      %s27 = sphi 0, %s26
      %s43 = sphi 0, %s27
      %s47 = sphi 0, %s47
      %s49 = sphi 0, %s47
      %s50 = sphi 0, %s49
      %s64 = sphi 0, %s50
      %s68 = sphi 0, %s68
      %s70 = sphi 0, %s68
      %s71 = sphi 0, %s70
      %s85 = sphi 0, %s71
      %s89 = sphi 0, %s89
      %s91 = sphi 0, %s89
      %s92 = sphi 0, %s91
      %s106 = sphi 0, %s92
      %s112 = sphi 0, %s114
      %s115 = sphi 0, %s112
      %s116 = sphi 0, %s115
      %s132 = sphi 0, %s116
    $region4: #{tpu_custom_call.1} parent=1 // loop_header_branch
      %16 = sbr.rel (%p14) target = $region8
    $region5: #{tpu_custom_call.1} parent=1 // loop_body
      %s18 = ssub.s32 %s13, 1
      %s19 = ssub.s32 %s13, 2
      %s20 = sadd.s32 %s13, 1
      %s21 = ssub.s32 %s13, %s20
      %p22 = scmp.eq.s32.totalorder %s21, 0
      %s24 = sadd.s32 %s23, 1
      %s25 = scalar_select %p22, %s23, %s24
      %p28 = pneg %p22
      %p29 = scmp.eq.s32.totalorder %s13, 1
      %p30 = por %p28, %p29
      %p31 = scmp.ne.s32.totalorder %s23, %s26
      %p32 = scmp.eq.s32.totalorder %s13, 0
      %p33 = por %p31, %p32
      %p34 = scmp.ne.s32.totalorder %s23, %s26
      %p35 = scmp.eq.s32.totalorder %s18, 1
      %p36 = por %p34, %p35
      %p37 = scmp.ne.s32.totalorder %s26, %s27
      %p38 = scmp.eq.s32.totalorder %s18, 0
      %p39 = por %p37, %p38
      %p40 = scmp.ne.s32.totalorder %s26, %s27
      %p41 = scmp.eq.s32.totalorder %s19, 1
      %p42 = por %p40, %p41
      %p44 = scmp.ne.s32.totalorder %s27, %s43
      %p45 = scmp.eq.s32.totalorder %s19, 0
      %p46 = por %p44, %p45
      %s48 = sadd.s32 %s47, 1
      %p51 = scmp.eq.s32.totalorder %s13, 1
      %p52 = scmp.ne.s32.totalorder %s47, %s49
      %p53 = scmp.eq.s32.totalorder %s13, 0
      %p54 = por %p52, %p53
      %p55 = scmp.ne.s32.totalorder %s47, %s49
      %p56 = scmp.eq.s32.totalorder %s18, 1
      %p57 = por %p55, %p56
      %p58 = scmp.ne.s32.totalorder %s49, %s50
      %p59 = scmp.eq.s32.totalorder %s18, 0
      %p60 = por %p58, %p59
      %p61 = scmp.ne.s32.totalorder %s49, %s50
      %p62 = scmp.eq.s32.totalorder %s19, 1
      %p63 = por %p61, %p62
      %p65 = scmp.ne.s32.totalorder %s50, %s64
      %p66 = scmp.eq.s32.totalorder %s19, 0
      %p67 = por %p65, %p66
      %s69 = sadd.s32 %s68, 1
      %p72 = scmp.eq.s32.totalorder %s13, 1
      %p73 = scmp.ne.s32.totalorder %s68, %s70
      %p74 = scmp.eq.s32.totalorder %s13, 0
      %p75 = por %p73, %p74
      %p76 = scmp.ne.s32.totalorder %s68, %s70
      %p77 = scmp.eq.s32.totalorder %s18, 1
      %p78 = por %p76, %p77
      %p79 = scmp.ne.s32.totalorder %s70, %s71
      %p80 = scmp.eq.s32.totalorder %s18, 0
      %p81 = por %p79, %p80
      %p82 = scmp.ne.s32.totalorder %s70, %s71
      %p83 = scmp.eq.s32.totalorder %s19, 1
      %p84 = por %p82, %p83
      %p86 = scmp.ne.s32.totalorder %s71, %s85
      %p87 = scmp.eq.s32.totalorder %s19, 0
      %p88 = por %p86, %p87
      %s90 = sadd.s32 %s89, 1
      %p93 = scmp.eq.s32.totalorder %s13, 1
      %p94 = scmp.ne.s32.totalorder %s89, %s91
      %p95 = scmp.eq.s32.totalorder %s13, 0
      %p96 = por %p94, %p95
      %p97 = scmp.ne.s32.totalorder %s89, %s91
      %p98 = scmp.eq.s32.totalorder %s18, 1
      %p99 = por %p97, %p98
      %p100 = scmp.ne.s32.totalorder %s91, %s92
      %p101 = scmp.eq.s32.totalorder %s18, 0
      %p102 = por %p100, %p101
      %p103 = scmp.ne.s32.totalorder %s91, %s92
      %p104 = scmp.eq.s32.totalorder %s19, 1
      %p105 = por %p103, %p104
      %p107 = scmp.ne.s32.totalorder %s92, %s106
      %p108 = scmp.eq.s32.totalorder %s19, 0
      %p109 = por %p107, %p108
      %s110 = ssub.s32 %s13, %s20
      %p111 = scmp.eq.s32.totalorder %s110, 0
      %s113 = sadd.s32 %s112, 1
      %s114 = scalar_select %p111, %s112, %s113
      %p117 = pneg %p111
      %p118 = scmp.eq.s32.totalorder %s13, 1
      %p119 = por %p117, %p118
      %p120 = scmp.ne.s32.totalorder %s112, %s115
      %p121 = scmp.eq.s32.totalorder %s13, 0
      %p122 = por %p120, %p121
      %p123 = scmp.ne.s32.totalorder %s112, %s115
      %p124 = scmp.eq.s32.totalorder %s18, 1
      %p125 = por %p123, %p124
      %p126 = scmp.ne.s32.totalorder %s115, %s116
      %p127 = scmp.eq.s32.totalorder %s18, 0
      %p128 = por %p126, %p127
      %p129 = scmp.ne.s32.totalorder %s115, %s116
      %p130 = scmp.eq.s32.totalorder %s19, 1
      %p131 = por %p129, %p130
      %p133 = scmp.ne.s32.totalorder %s116, %s132
      %p134 = scmp.eq.s32.totalorder %s19, 0
      %p135 = por %p133, %p134
      %p136 = scmp.le.s32.totalorder 1, %s13
      %p137 = scmp.lt.s32.totalorder %s13, 3
      %p138 = pnand %p136, %p137
      %p139 = pneg %p138
      // Predicated region
      $region9: #{tpu_custom_call.1} parent=5 // pred_check
        _
      $region10: #{tpu_custom_call.1} parent=5 // pred_check_branch
        %141 = sbr.rel (%p138) target = $region12
      $region11: #{tpu_custom_call.1} parent=5 // pred_region
        %s142 = ssub.s32 %s13, 1
        // Predicated region
        $region13: #{tpu_custom_call.1} parent=11 // pred_check
          %p143 = pneg %p60
        $region14: #{tpu_custom_call.1} parent=11 // pred_check_branch
          %145 = sbr.rel (%p143) target = $region16
        $region15: #{tpu_custom_call.1} parent=11 // pred_region
          _
        $region16: #{tpu_custom_call.1} parent=11 // pred_fallthru
          _
        // Predicated region
        $region17: #{tpu_custom_call.1} parent=11 // pred_check
          %p146 = pneg %p81
        $region18: #{tpu_custom_call.1} parent=11 // pred_check_branch
          %148 = sbr.rel (%p146) target = $region20
        $region19: #{tpu_custom_call.1} parent=11 // pred_region
          _
        $region20: #{tpu_custom_call.1} parent=11 // pred_fallthru
          _
        // Predicated region
        $region21: #{tpu_custom_call.1} parent=11 // pred_check
          %p149 = pneg %p102
        $region22: #{tpu_custom_call.1} parent=11 // pred_check_branch
          %151 = sbr.rel (%p149) target = $region24
        $region23: #{tpu_custom_call.1} parent=11 // pred_region
          _
        $region24: #{tpu_custom_call.1} parent=11 // pred_fallthru
          _
      $region12: #{tpu_custom_call.1} parent=5 // pred_fallthru
        _
      %p152 = scmp.lt.s32.totalorder %s13, 2
      // Predicated region
      $region25: #{tpu_custom_call.1} parent=5 // pred_check
        %p153 = pneg %p152
      $region26: #{tpu_custom_call.1} parent=5 // pred_check_branch
        %155 = sbr.rel (%p153) target = $region28
      $region27: #{tpu_custom_call.1} parent=5 // pred_region
        // Predicated region
        $region29: #{tpu_custom_call.1} parent=27 // pred_check
          %p156 = pneg %p33
        $region30: #{tpu_custom_call.1} parent=27 // pred_check_branch
          %158 = sbr.rel (%p156) target = $region32
        $region31: #{tpu_custom_call.1} parent=27 // pred_region
          %p159 = scmp.lt.s32.totalorder %s13, 1
          %s160 = scalar_select %p159, %s13, 1
          %s161 = smul.addr %s160, 8
          %s162 = scalar_lea.vmem %s0, %s161
        $region32: #{tpu_custom_call.1} parent=27 // pred_fallthru
          _
      $region28: #{tpu_custom_call.1} parent=5 // pred_fallthru
        _
      %p163 = scmp.le.s32.totalorder 1, %s13
      %p164 = scmp.lt.s32.totalorder %s13, 3
      %p165 = pnand %p163, %p164
      %p166 = pneg %p165
      // Predicated region
      $region33: #{tpu_custom_call.1} parent=5 // pred_check
        _
      $region34: #{tpu_custom_call.1} parent=5 // pred_check_branch
        %168 = sbr.rel (%p165) target = $region36
      $region35: #{tpu_custom_call.1} parent=5 // pred_region
        %s169 = ssub.s32 %s13, 1
        %p170 = scmp.lt.s32.totalorder %s18, 1
        %s171 = scalar_select %p170, %s18, 1
        %s172 = smul.addr %s171, 8
        %s173 = scalar_lea.vmem %s0, %s172
        %p174 = pneg %p39
        %p175 = pneg %p36
        %p176 = pneg %p60
        %p177 = pneg %p57
        %p178 = pneg %p81
        %p179 = pneg %p78
        %p180 = pneg %p102
        %p181 = pneg %p99
        %p182 = pneg %p128
        %p183 = pneg %p125
        %s184 = sand.u32 %s115, 1
        %s185 = scalar_lea.sflag [#allocation3], %s184
        %s186 = sand.u32 %s115, 1
        %s187 = smul.addr %s186, 8
        %s188 = scalar_lea.vmem [#allocation2], %s187
        %p189 = scmp.lt.s32.totalorder %s18, 1
        %s190 = scalar_select %p189, %s18, 1
        %s191 = smul.addr %s190, 8
        %s192 = scalar_lea.vmem %s0, %s191
        %v193 = vld [vmem:[%s192] sm:$0xff]
        %v194 = vld [vmem:[%s1] sm:$0xff]
        %v195 = vld [vmem:[%s1 + $0x8] sm:$0xff]
        %v196 = vld [vmem:[%s1 + $0x10] sm:$0xff]
        %v197 = vld [vmem:[%s1 + $0x18] sm:$0xff]
        %v198 = vld [vmem:[%s1 + $0x20] sm:$0xff]
        %v199 = vld [vmem:[%s1 + $0x28] sm:$0xff]
        %v200 = vld [vmem:[%s1 + $0x30] sm:$0xff]
        %v201 = vld [vmem:[%s1 + $0x38] sm:$0xff]
        %v202 = vld [vmem:[%s1 + $0x40] sm:$0xff]
        %v203 = vld [vmem:[%s1 + $0x48] sm:$0xff]
        %v204 = vld [vmem:[%s1 + $0x50] sm:$0xff]
        %v205 = vld [vmem:[%s1 + $0x58] sm:$0xff]
        %v206 = vld [vmem:[%s1 + $0x60] sm:$0xff]
        %v207 = vld [vmem:[%s1 + $0x68] sm:$0xff]
        %v208 = vld [vmem:[%s1 + $0x70] sm:$0xff]
        %v209 = vld [vmem:[%s1 + $0x78] sm:$0xff]
        %v210 = vld [vmem:[%s1 + $0x80] sm:$0xff]
        %v211 = vld [vmem:[%s1 + $0x88] sm:$0xff]
        %v212 = vld [vmem:[%s1 + $0x90] sm:$0xff]
        %v213 = vld [vmem:[%s1 + $0x98] sm:$0xff]
        %v214 = vld [vmem:[%s1 + $0xa0] sm:$0xff]
        %v215 = vld [vmem:[%s1 + $0xa8] sm:$0xff]
        %v216 = vld [vmem:[%s1 + $0xb0] sm:$0xff]
        %v217 = vld [vmem:[%s1 + $0xb8] sm:$0xff]
        %v218 = vld [vmem:[%s1 + $0xc0] sm:$0xff]
        %v219 = vld [vmem:[%s1 + $0xc8] sm:$0xff]
        %v220 = vld [vmem:[%s1 + $0xd0] sm:$0xff]
        %v221 = vld [vmem:[%s1 + $0xd8] sm:$0xff]
        %v222 = vld [vmem:[%s1 + $0xe0] sm:$0xff]
        %v223 = vld [vmem:[%s1 + $0xe8] sm:$0xff]
        %v224 = vld [vmem:[%s1 + $0xf0] sm:$0xff]
        %v225 = vld [vmem:[%s1 + $0xf8] sm:$0xff]
        %v226 = vld [vmem:[%s1 + $0x100] sm:$0xff]
        %v227 = vld [vmem:[%s1 + $0x108] sm:$0xff]
        %v228 = vld [vmem:[%s1 + $0x110] sm:$0xff]
        %v229 = vld [vmem:[%s1 + $0x118] sm:$0xff]
        %v230 = vld [vmem:[%s1 + $0x120] sm:$0xff]
        %v231 = vld [vmem:[%s1 + $0x128] sm:$0xff]
        %v232 = vld [vmem:[%s1 + $0x130] sm:$0xff]
        %v233 = vld [vmem:[%s1 + $0x138] sm:$0xff]
        %v234 = vld [vmem:[%s1 + $0x140] sm:$0xff]
        %v235 = vld [vmem:[%s1 + $0x148] sm:$0xff]
        %v236 = vld [vmem:[%s1 + $0x150] sm:$0xff]
        %v237 = vld [vmem:[%s1 + $0x158] sm:$0xff]
        %v238 = vld [vmem:[%s1 + $0x160] sm:$0xff]
        %v239 = vld [vmem:[%s1 + $0x168] sm:$0xff]
        %v240 = vld [vmem:[%s1 + $0x170] sm:$0xff]
        %v241 = vld [vmem:[%s1 + $0x178] sm:$0xff]
        %vm242 = vcmask 261120
        %v244 = vsel %vm242, %v193, 0
        %246 = vmatpush.msra.mxu0 0.0
        %247 = vmatpush.msra.mxu0 0.0
        %248 = vmatpush.msra.mxu0 0.0
        %249 = vmatpush.msra.mxu0 0.0
        %250 = vmatpush.msra.mxu0 0.0
        %251 = vmatpush.msra.mxu0 0.0
        %252 = vmatpush.msra.mxu0 0.0
        %253 = vmatpush.msra.mxu0 0.0
        %254 = vmatpush.msra.mxu0 0.0
        %255 = vmatpush.msra.mxu0 0.0
        %256 = vmatpush.msra.mxu0 0.0
        %257 = vmatpush.msra.mxu0 0.0
        %258 = vmatpush.msra.mxu0 %v230
        %259 = vmatpush.msra.mxu0 %v218
        %260 = vmatpush.msra.mxu0 %v206
        %261 = vmatpush.msra.mxu0 %v194
        %262 = vmatmul.f32.gmra.mxu0 %v244
        %v263 = vpop.f32.mrf.mxu0
        %v264 = vadd.f32 0.0, %v263
        %265 = vdwg.mxu0
        %266 = vmatpush.msra.mxu0 0.0
        %267 = vmatpush.msra.mxu0 0.0
        %268 = vmatpush.msra.mxu0 0.0
        %269 = vmatpush.msra.mxu0 0.0
        %270 = vmatpush.msra.mxu0 0.0
        %271 = vmatpush.msra.mxu0 0.0
        %272 = vmatpush.msra.mxu0 0.0
        %273 = vmatpush.msra.mxu0 0.0
        %274 = vmatpush.msra.mxu0 0.0
        %275 = vmatpush.msra.mxu0 0.0
        %276 = vmatpush.msra.mxu0 0.0
        %277 = vmatpush.msra.mxu0 0.0
        %278 = vmatpush.msra.mxu0 %v231
        %279 = vmatpush.msra.mxu0 %v219
        %280 = vmatpush.msra.mxu0 %v207
        %281 = vmatpush.msra.mxu0 %v195
        %282 = vmatmul.f32.gmra.mxu0 %v244
        %v283 = vpop.f32.mrf.mxu0
        %v284 = vadd.f32 0.0, %v283
        %285 = vdwg.mxu0
        %286 = vmatpush.msra.mxu0 0.0
        %287 = vmatpush.msra.mxu0 0.0
        %288 = vmatpush.msra.mxu0 0.0
        %289 = vmatpush.msra.mxu0 0.0
        %290 = vmatpush.msra.mxu0 0.0
        %291 = vmatpush.msra.mxu0 0.0
        %292 = vmatpush.msra.mxu0 0.0
        %293 = vmatpush.msra.mxu0 0.0
        %294 = vmatpush.msra.mxu0 0.0
        %295 = vmatpush.msra.mxu0 0.0
        %296 = vmatpush.msra.mxu0 0.0
        %297 = vmatpush.msra.mxu0 0.0
        %298 = vmatpush.msra.mxu0 %v232
        %299 = vmatpush.msra.mxu0 %v220
        %300 = vmatpush.msra.mxu0 %v208
        %301 = vmatpush.msra.mxu0 %v196
        %302 = vmatmul.f32.gmra.mxu0 %v244
        %v303 = vpop.f32.mrf.mxu0
        %v304 = vadd.f32 0.0, %v303
        %305 = vdwg.mxu0
        %306 = vmatpush.msra.mxu0 0.0
        %307 = vmatpush.msra.mxu0 0.0
        %308 = vmatpush.msra.mxu0 0.0
        %309 = vmatpush.msra.mxu0 0.0
        %310 = vmatpush.msra.mxu0 0.0
        %311 = vmatpush.msra.mxu0 0.0
        %312 = vmatpush.msra.mxu0 0.0
        %313 = vmatpush.msra.mxu0 0.0
        %314 = vmatpush.msra.mxu0 0.0
        %315 = vmatpush.msra.mxu0 0.0
        %316 = vmatpush.msra.mxu0 0.0
        %317 = vmatpush.msra.mxu0 0.0
        %318 = vmatpush.msra.mxu0 %v233
        %319 = vmatpush.msra.mxu0 %v221
        %320 = vmatpush.msra.mxu0 %v209
        %321 = vmatpush.msra.mxu0 %v197
        %322 = vmatmul.f32.gmra.mxu0 %v244
        %v323 = vpop.f32.mrf.mxu0
        %v324 = vadd.f32 0.0, %v323
        %325 = vdwg.mxu0
        %326 = vmatpush.msra.mxu0 0.0
        %327 = vmatpush.msra.mxu0 0.0
        %328 = vmatpush.msra.mxu0 0.0
        %329 = vmatpush.msra.mxu0 0.0
        %330 = vmatpush.msra.mxu0 0.0
        %331 = vmatpush.msra.mxu0 0.0
        %332 = vmatpush.msra.mxu0 0.0
        %333 = vmatpush.msra.mxu0 0.0
        %334 = vmatpush.msra.mxu0 0.0
        %335 = vmatpush.msra.mxu0 0.0
        %336 = vmatpush.msra.mxu0 0.0
        %337 = vmatpush.msra.mxu0 0.0
        %338 = vmatpush.msra.mxu0 %v234
        %339 = vmatpush.msra.mxu0 %v222
        %340 = vmatpush.msra.mxu0 %v210
        %341 = vmatpush.msra.mxu0 %v198
        %342 = vmatmul.f32.gmra.mxu0 %v244
        %v343 = vpop.f32.mrf.mxu0
        %v344 = vadd.f32 0.0, %v343
        %345 = vdwg.mxu0
        %346 = vmatpush.msra.mxu0 0.0
        %347 = vmatpush.msra.mxu0 0.0
        %348 = vmatpush.msra.mxu0 0.0
        %349 = vmatpush.msra.mxu0 0.0
        %350 = vmatpush.msra.mxu0 0.0
        %351 = vmatpush.msra.mxu0 0.0
        %352 = vmatpush.msra.mxu0 0.0
        %353 = vmatpush.msra.mxu0 0.0
        %354 = vmatpush.msra.mxu0 0.0
        %355 = vmatpush.msra.mxu0 0.0
        %356 = vmatpush.msra.mxu0 0.0
        %357 = vmatpush.msra.mxu0 0.0
        %358 = vmatpush.msra.mxu0 %v235
        %359 = vmatpush.msra.mxu0 %v223
        %360 = vmatpush.msra.mxu0 %v211
        %361 = vmatpush.msra.mxu0 %v199
        %362 = vmatmul.f32.gmra.mxu0 %v244
        %v363 = vpop.f32.mrf.mxu0
        %v364 = vadd.f32 0.0, %v363
        %365 = vdwg.mxu0
        %366 = vmatpush.msra.mxu0 0.0
        %367 = vmatpush.msra.mxu0 0.0
        %368 = vmatpush.msra.mxu0 0.0
        %369 = vmatpush.msra.mxu0 0.0
        %370 = vmatpush.msra.mxu0 0.0
        %371 = vmatpush.msra.mxu0 0.0
        %372 = vmatpush.msra.mxu0 0.0
        %373 = vmatpush.msra.mxu0 0.0
        %374 = vmatpush.msra.mxu0 0.0
        %375 = vmatpush.msra.mxu0 0.0
        %376 = vmatpush.msra.mxu0 0.0
        %377 = vmatpush.msra.mxu0 0.0
        %378 = vmatpush.msra.mxu0 %v236
        %379 = vmatpush.msra.mxu0 %v224
        %380 = vmatpush.msra.mxu0 %v212
        %381 = vmatpush.msra.mxu0 %v200
        %382 = vmatmul.f32.gmra.mxu0 %v244
        %v383 = vpop.f32.mrf.mxu0
        %v384 = vadd.f32 0.0, %v383
        %385 = vdwg.mxu0
        %386 = vmatpush.msra.mxu0 0.0
        %387 = vmatpush.msra.mxu0 0.0
        %388 = vmatpush.msra.mxu0 0.0
        %389 = vmatpush.msra.mxu0 0.0
        %390 = vmatpush.msra.mxu0 0.0
        %391 = vmatpush.msra.mxu0 0.0
        %392 = vmatpush.msra.mxu0 0.0
        %393 = vmatpush.msra.mxu0 0.0
        %394 = vmatpush.msra.mxu0 0.0
        %395 = vmatpush.msra.mxu0 0.0
        %396 = vmatpush.msra.mxu0 0.0
        %397 = vmatpush.msra.mxu0 0.0
        %398 = vmatpush.msra.mxu0 %v237
        %399 = vmatpush.msra.mxu0 %v225
        %400 = vmatpush.msra.mxu0 %v213
        %401 = vmatpush.msra.mxu0 %v201
        %402 = vmatmul.f32.gmra.mxu0 %v244
        %v403 = vpop.f32.mrf.mxu0
        %v404 = vadd.f32 0.0, %v403
        %405 = vdwg.mxu0
        %406 = vmatpush.msra.mxu0 0.0
        %407 = vmatpush.msra.mxu0 0.0
        %408 = vmatpush.msra.mxu0 0.0
        %409 = vmatpush.msra.mxu0 0.0
        %410 = vmatpush.msra.mxu0 0.0
        %411 = vmatpush.msra.mxu0 0.0
        %412 = vmatpush.msra.mxu0 0.0
        %413 = vmatpush.msra.mxu0 0.0
        %414 = vmatpush.msra.mxu0 0.0
        %415 = vmatpush.msra.mxu0 0.0
        %416 = vmatpush.msra.mxu0 0.0
        %417 = vmatpush.msra.mxu0 0.0
        %418 = vmatpush.msra.mxu0 %v238
        %419 = vmatpush.msra.mxu0 %v226
        %420 = vmatpush.msra.mxu0 %v214
        %421 = vmatpush.msra.mxu0 %v202
        %422 = vmatmul.f32.gmra.mxu0 %v244
        %v423 = vpop.f32.mrf.mxu0
        %v424 = vadd.f32 0.0, %v423
        %425 = vdwg.mxu0
        %426 = vmatpush.msra.mxu0 0.0
        %427 = vmatpush.msra.mxu0 0.0
        %428 = vmatpush.msra.mxu0 0.0
        %429 = vmatpush.msra.mxu0 0.0
        %430 = vmatpush.msra.mxu0 0.0
        %431 = vmatpush.msra.mxu0 0.0
        %432 = vmatpush.msra.mxu0 0.0
        %433 = vmatpush.msra.mxu0 0.0
        %434 = vmatpush.msra.mxu0 0.0
        %435 = vmatpush.msra.mxu0 0.0
        %436 = vmatpush.msra.mxu0 0.0
        %437 = vmatpush.msra.mxu0 0.0
        %438 = vmatpush.msra.mxu0 %v239
        %439 = vmatpush.msra.mxu0 %v227
        %440 = vmatpush.msra.mxu0 %v215
        %441 = vmatpush.msra.mxu0 %v203
        %442 = vmatmul.f32.gmra.mxu0 %v244
        %v443 = vpop.f32.mrf.mxu0
        %v444 = vadd.f32 0.0, %v443
        %445 = vdwg.mxu0
        %446 = vmatpush.msra.mxu0 0.0
        %447 = vmatpush.msra.mxu0 0.0
        %448 = vmatpush.msra.mxu0 0.0
        %449 = vmatpush.msra.mxu0 0.0
        %450 = vmatpush.msra.mxu0 0.0
        %451 = vmatpush.msra.mxu0 0.0
        %452 = vmatpush.msra.mxu0 0.0
        %453 = vmatpush.msra.mxu0 0.0
        %454 = vmatpush.msra.mxu0 0.0
        %455 = vmatpush.msra.mxu0 0.0
        %456 = vmatpush.msra.mxu0 0.0
        %457 = vmatpush.msra.mxu0 0.0
        %458 = vmatpush.msra.mxu0 %v240
        %459 = vmatpush.msra.mxu0 %v228
        %460 = vmatpush.msra.mxu0 %v216
        %461 = vmatpush.msra.mxu0 %v204
        %462 = vmatmul.f32.gmra.mxu0 %v244
        %v463 = vpop.f32.mrf.mxu0
        %v464 = vadd.f32 0.0, %v463
        %465 = vdwg.mxu0
        %466 = vmatpush.msra.mxu0 0.0
        %467 = vmatpush.msra.mxu0 0.0
        %468 = vmatpush.msra.mxu0 0.0
        %469 = vmatpush.msra.mxu0 0.0
        %470 = vmatpush.msra.mxu0 0.0
        %471 = vmatpush.msra.mxu0 0.0
        %472 = vmatpush.msra.mxu0 0.0
        %473 = vmatpush.msra.mxu0 0.0
        %474 = vmatpush.msra.mxu0 0.0
        %475 = vmatpush.msra.mxu0 0.0
        %476 = vmatpush.msra.mxu0 0.0
        %477 = vmatpush.msra.mxu0 0.0
        %478 = vmatpush.msra.mxu0 %v241
        %479 = vmatpush.msra.mxu0 %v229
        %480 = vmatpush.msra.mxu0 %v217
        %481 = vmatpush.msra.mxu0 %v205
        %482 = vmatmul.f32.gmra.mxu0 %v244
        %v483 = vpop.f32.mrf.mxu0
        %v484 = vadd.f32 0.0, %v483
        %485 = vdwg.mxu0
        %vm486 = vcmask 523264
        %v488 = vsel %vm486, %v264, 0
        %v491 = vsel %vm486, %v344, 0
        %493 = vmatpush.xpose.msra.mxu0 0.0
        %494 = vmatpush.xpose.msra.mxu0 0.0
        %495 = vmatpush.xpose.msra.mxu0 0.0
        %496 = vmatpush.xpose.msra.mxu0 0.0
        %497 = vmatpush.xpose.msra.mxu0 0.0
        %498 = vmatpush.xpose.msra.mxu0 0.0
        %499 = vmatpush.xpose.msra.mxu0 0.0
        %500 = vmatpush.xpose.msra.mxu0 0.0
        %501 = vmatpush.xpose.msra.mxu0 0.0
        %502 = vmatpush.xpose.msra.mxu0 0.0
        %503 = vmatpush.xpose.msra.mxu0 0.0
        %504 = vmatpush.xpose.msra.mxu0 0.0
        %505 = vmatpush.xpose.msra.mxu0 0.0
        %506 = vmatpush.xpose.msra.mxu0 0.0
        %507 = vmatpush.xpose.msra.mxu0 0.0
        %508 = vmatpush.xpose.msra.mxu0 %v491
        %509 = vmatmul.f32.gmra.mxu0 %v488
        %v510 = vpop.f32.mrf.mxu0
        %v511 = vadd.f32 0.0, %v510
        %512 = vdwg.mxu0
        %v513 = vmul.f32 %v511, 0.125
        %vm514 = vcmask 64512
        %v515 = vsel %vm514, %v513, -inf
        %516 = vmax.xlane.f32.xlu0 %v515
        %v517 = vpop.xlane.xlu0 %516
        %v518 = vsub.f32 %v513, %v517
        %v519 = vmul.f32 %v518, 1.442695
        %v520 = vpow.pop %v519
        %v521 = vsel %vm514, %v520, 0.0
        %522 = vadd.xlane.f32.xlu0 %v521
        %v523 = vpop.xlane.xlu0 %522
        %v524 = vrcp.pop %v523
        %v525 = vmul.f32 %v520, %v524
        %v527 = vsel %vm514, %v525, 0
        %529 = vmatpush.msra.mxu0 0.0
        %530 = vmatpush.msra.mxu0 0.0
        %531 = vmatpush.msra.mxu0 0.0
        %532 = vmatpush.msra.mxu0 0.0
        %533 = vmatpush.msra.mxu0 0.0
        %534 = vmatpush.msra.mxu0 0.0
        %535 = vmatpush.msra.mxu0 0.0
        %536 = vmatpush.msra.mxu0 0.0
        %537 = vmatpush.msra.mxu0 0.0
        %538 = vmatpush.msra.mxu0 0.0
        %539 = vmatpush.msra.mxu0 0.0
        %540 = vmatpush.msra.mxu0 0.0
        %541 = vmatpush.msra.mxu0 0.0
        %542 = vmatpush.msra.mxu0 0.0
        %543 = vmatpush.msra.mxu0 0.0
        %544 = vmatpush.msra.mxu0 %v424
        %545 = vmatmul.f32.gmra.mxu0 %v527
        %v546 = vpop.f32.mrf.mxu0
        %v547 = vadd.f32 0.0, %v546
        %548 = vdwg.mxu0
        %549 = vrot.lane.b32.xlu0 %v264, 64
        %v550 = vpop.permute.xlu0 %549
        %551 = vrot.lane.b32.xlu0 %v344, 64
        %v552 = vpop.permute.xlu0 %551
        %v553 = vsel %vm486, %v550, 0
        %v555 = vsel %vm486, %v552, 0
        %557 = vmatpush.xpose.msra.mxu0 0.0
        %558 = vmatpush.xpose.msra.mxu0 0.0
        %559 = vmatpush.xpose.msra.mxu0 0.0
        %560 = vmatpush.xpose.msra.mxu0 0.0
        %561 = vmatpush.xpose.msra.mxu0 0.0
        %562 = vmatpush.xpose.msra.mxu0 0.0
        %563 = vmatpush.xpose.msra.mxu0 0.0
        %564 = vmatpush.xpose.msra.mxu0 0.0
        %565 = vmatpush.xpose.msra.mxu0 0.0
        %566 = vmatpush.xpose.msra.mxu0 0.0
        %567 = vmatpush.xpose.msra.mxu0 0.0
        %568 = vmatpush.xpose.msra.mxu0 0.0
        %569 = vmatpush.xpose.msra.mxu0 0.0
        %570 = vmatpush.xpose.msra.mxu0 0.0
        %571 = vmatpush.xpose.msra.mxu0 0.0
        %572 = vmatpush.xpose.msra.mxu0 %v555
        %573 = vmatmul.f32.gmra.mxu0 %v553
        %v574 = vpop.f32.mrf.mxu0
        %v575 = vadd.f32 0.0, %v574
        %576 = vdwg.mxu0
        %v577 = vmul.f32 %v575, 0.125
        %v578 = vsel %vm514, %v577, -inf
        %579 = vmax.xlane.f32.xlu0 %v578
        %v580 = vpop.xlane.xlu0 %579
        %v581 = vsub.f32 %v577, %v580
        %v582 = vmul.f32 %v581, 1.442695
        %v583 = vpow.pop %v582
        %v584 = vsel %vm514, %v583, 0.0
        %585 = vadd.xlane.f32.xlu0 %v584
        %v586 = vpop.xlane.xlu0 %585
        %v587 = vrcp.pop %v586
        %v588 = vmul.f32 %v583, %v587
        %590 = vrot.lane.b32.xlu0 %v424, 64
        %v591 = vpop.permute.xlu0 %590
        %v594 = vsel %vm514, %v588, 0
        %596 = vmatpush.msra.mxu0 0.0
        %597 = vmatpush.msra.mxu0 0.0
        %598 = vmatpush.msra.mxu0 0.0
        %599 = vmatpush.msra.mxu0 0.0
        %600 = vmatpush.msra.mxu0 0.0
        %601 = vmatpush.msra.mxu0 0.0
        %602 = vmatpush.msra.mxu0 0.0
        %603 = vmatpush.msra.mxu0 0.0
        %604 = vmatpush.msra.mxu0 0.0
        %605 = vmatpush.msra.mxu0 0.0
        %606 = vmatpush.msra.mxu0 0.0
        %607 = vmatpush.msra.mxu0 0.0
        %608 = vmatpush.msra.mxu0 0.0
        %609 = vmatpush.msra.mxu0 0.0
        %610 = vmatpush.msra.mxu0 0.0
        %611 = vmatpush.msra.mxu0 %v591
        %612 = vmatmul.f32.gmra.mxu0 %v594
        %v613 = vpop.f32.mrf.mxu0
        %v614 = vadd.f32 0.0, %v613
        %615 = vdwg.mxu0
        %v617 = vsel %vm486, %v284, 0
        %v620 = vsel %vm486, %v364, 0
        %622 = vmatpush.xpose.msra.mxu0 0.0
        %623 = vmatpush.xpose.msra.mxu0 0.0
        %624 = vmatpush.xpose.msra.mxu0 0.0
        %625 = vmatpush.xpose.msra.mxu0 0.0
        %626 = vmatpush.xpose.msra.mxu0 0.0
        %627 = vmatpush.xpose.msra.mxu0 0.0
        %628 = vmatpush.xpose.msra.mxu0 0.0
        %629 = vmatpush.xpose.msra.mxu0 0.0
        %630 = vmatpush.xpose.msra.mxu0 0.0
        %631 = vmatpush.xpose.msra.mxu0 0.0
        %632 = vmatpush.xpose.msra.mxu0 0.0
        %633 = vmatpush.xpose.msra.mxu0 0.0
        %634 = vmatpush.xpose.msra.mxu0 0.0
        %635 = vmatpush.xpose.msra.mxu0 0.0
        %636 = vmatpush.xpose.msra.mxu0 0.0
        %637 = vmatpush.xpose.msra.mxu0 %v620
        %638 = vmatmul.f32.gmra.mxu0 %v617
        %v639 = vpop.f32.mrf.mxu0
        %v640 = vadd.f32 0.0, %v639
        %641 = vdwg.mxu0
        %v642 = vmul.f32 %v640, 0.125
        %v643 = vsel %vm514, %v642, -inf
        %644 = vmax.xlane.f32.xlu0 %v643
        %v645 = vpop.xlane.xlu0 %644
        %v646 = vsub.f32 %v642, %v645
        %v647 = vmul.f32 %v646, 1.442695
        %v648 = vpow.pop %v647
        %v649 = vsel %vm514, %v648, 0.0
        %650 = vadd.xlane.f32.xlu0 %v649
        %v651 = vpop.xlane.xlu0 %650
        %v652 = vrcp.pop %v651
        %v653 = vmul.f32 %v648, %v652
        %v655 = vsel %vm514, %v653, 0
        %657 = vmatpush.msra.mxu0 0.0
        %658 = vmatpush.msra.mxu0 0.0
        %659 = vmatpush.msra.mxu0 0.0
        %660 = vmatpush.msra.mxu0 0.0
        %661 = vmatpush.msra.mxu0 0.0
        %662 = vmatpush.msra.mxu0 0.0
        %663 = vmatpush.msra.mxu0 0.0
        %664 = vmatpush.msra.mxu0 0.0
        %665 = vmatpush.msra.mxu0 0.0
        %666 = vmatpush.msra.mxu0 0.0
        %667 = vmatpush.msra.mxu0 0.0
        %668 = vmatpush.msra.mxu0 0.0
        %669 = vmatpush.msra.mxu0 0.0
        %670 = vmatpush.msra.mxu0 0.0
        %671 = vmatpush.msra.mxu0 0.0
        %672 = vmatpush.msra.mxu0 %v444
        %673 = vmatmul.f32.gmra.mxu0 %v655
        %v674 = vpop.f32.mrf.mxu0
        %v675 = vadd.f32 0.0, %v674
        %676 = vdwg.mxu0
        %677 = vrot.lane.b32.xlu0 %v284, 64
        %v678 = vpop.permute.xlu0 %677
        %679 = vrot.lane.b32.xlu0 %v364, 64
        %v680 = vpop.permute.xlu0 %679
        %v681 = vsel %vm486, %v678, 0
        %v683 = vsel %vm486, %v680, 0
        %685 = vmatpush.xpose.msra.mxu0 0.0
        %686 = vmatpush.xpose.msra.mxu0 0.0
        %687 = vmatpush.xpose.msra.mxu0 0.0
        %688 = vmatpush.xpose.msra.mxu0 0.0
        %689 = vmatpush.xpose.msra.mxu0 0.0
        %690 = vmatpush.xpose.msra.mxu0 0.0
        %691 = vmatpush.xpose.msra.mxu0 0.0
        %692 = vmatpush.xpose.msra.mxu0 0.0
        %693 = vmatpush.xpose.msra.mxu0 0.0
        %694 = vmatpush.xpose.msra.mxu0 0.0
        %695 = vmatpush.xpose.msra.mxu0 0.0
        %696 = vmatpush.xpose.msra.mxu0 0.0
        %697 = vmatpush.xpose.msra.mxu0 0.0
        %698 = vmatpush.xpose.msra.mxu0 0.0
        %699 = vmatpush.xpose.msra.mxu0 0.0
        %700 = vmatpush.xpose.msra.mxu0 %v683
        %701 = vmatmul.f32.gmra.mxu0 %v681
        %v702 = vpop.f32.mrf.mxu0
        %v703 = vadd.f32 0.0, %v702
        %704 = vdwg.mxu0
        %v705 = vmul.f32 %v703, 0.125
        %v706 = vsel %vm514, %v705, -inf
        %707 = vmax.xlane.f32.xlu0 %v706
        %v708 = vpop.xlane.xlu0 %707
        %v709 = vsub.f32 %v705, %v708
        %v710 = vmul.f32 %v709, 1.442695
        %v711 = vpow.pop %v710
        %v712 = vsel %vm514, %v711, 0.0
        %713 = vadd.xlane.f32.xlu0 %v712
        %v714 = vpop.xlane.xlu0 %713
        %v715 = vrcp.pop %v714
        %v716 = vmul.f32 %v711, %v715
        %718 = vrot.lane.b32.xlu0 %v444, 64
        %v719 = vpop.permute.xlu0 %718
        %v722 = vsel %vm514, %v716, 0
        %724 = vmatpush.msra.mxu0 0.0
        %725 = vmatpush.msra.mxu0 0.0
        %726 = vmatpush.msra.mxu0 0.0
        %727 = vmatpush.msra.mxu0 0.0
        %728 = vmatpush.msra.mxu0 0.0
        %729 = vmatpush.msra.mxu0 0.0
        %730 = vmatpush.msra.mxu0 0.0
        %731 = vmatpush.msra.mxu0 0.0
        %732 = vmatpush.msra.mxu0 0.0
        %733 = vmatpush.msra.mxu0 0.0
        %734 = vmatpush.msra.mxu0 0.0
        %735 = vmatpush.msra.mxu0 0.0
        %736 = vmatpush.msra.mxu0 0.0
        %737 = vmatpush.msra.mxu0 0.0
        %738 = vmatpush.msra.mxu0 0.0
        %739 = vmatpush.msra.mxu0 %v719
        %740 = vmatmul.f32.gmra.mxu0 %v722
        %v741 = vpop.f32.mrf.mxu0
        %v742 = vadd.f32 0.0, %v741
        %743 = vdwg.mxu0
        %v745 = vsel %vm486, %v304, 0
        %v748 = vsel %vm486, %v384, 0
        %750 = vmatpush.xpose.msra.mxu0 0.0
        %751 = vmatpush.xpose.msra.mxu0 0.0
        %752 = vmatpush.xpose.msra.mxu0 0.0
        %753 = vmatpush.xpose.msra.mxu0 0.0
        %754 = vmatpush.xpose.msra.mxu0 0.0
        %755 = vmatpush.xpose.msra.mxu0 0.0
        %756 = vmatpush.xpose.msra.mxu0 0.0
        %757 = vmatpush.xpose.msra.mxu0 0.0
        %758 = vmatpush.xpose.msra.mxu0 0.0
        %759 = vmatpush.xpose.msra.mxu0 0.0
        %760 = vmatpush.xpose.msra.mxu0 0.0
        %761 = vmatpush.xpose.msra.mxu0 0.0
        %762 = vmatpush.xpose.msra.mxu0 0.0
        %763 = vmatpush.xpose.msra.mxu0 0.0
        %764 = vmatpush.xpose.msra.mxu0 0.0
        %765 = vmatpush.xpose.msra.mxu0 %v748
        %766 = vmatmul.f32.gmra.mxu0 %v745
        %v767 = vpop.f32.mrf.mxu0
        %v768 = vadd.f32 0.0, %v767
        %769 = vdwg.mxu0
        %v770 = vmul.f32 %v768, 0.125
        %v771 = vsel %vm514, %v770, -inf
        %772 = vmax.xlane.f32.xlu0 %v771
        %v773 = vpop.xlane.xlu0 %772
        %v774 = vsub.f32 %v770, %v773
        %v775 = vmul.f32 %v774, 1.442695
        %v776 = vpow.pop %v775
        %v777 = vsel %vm514, %v776, 0.0
        %778 = vadd.xlane.f32.xlu0 %v777
        %v779 = vpop.xlane.xlu0 %778
        %v780 = vrcp.pop %v779
        %v781 = vmul.f32 %v776, %v780
        %v783 = vsel %vm514, %v781, 0
        %785 = vmatpush.msra.mxu0 0.0
        %786 = vmatpush.msra.mxu0 0.0
        %787 = vmatpush.msra.mxu0 0.0
        %788 = vmatpush.msra.mxu0 0.0
        %789 = vmatpush.msra.mxu0 0.0
        %790 = vmatpush.msra.mxu0 0.0
        %791 = vmatpush.msra.mxu0 0.0
        %792 = vmatpush.msra.mxu0 0.0
        %793 = vmatpush.msra.mxu0 0.0
        %794 = vmatpush.msra.mxu0 0.0
        %795 = vmatpush.msra.mxu0 0.0
        %796 = vmatpush.msra.mxu0 0.0
        %797 = vmatpush.msra.mxu0 0.0
        %798 = vmatpush.msra.mxu0 0.0
        %799 = vmatpush.msra.mxu0 0.0
        %800 = vmatpush.msra.mxu0 %v464
        %801 = vmatmul.f32.gmra.mxu0 %v783
        %v802 = vpop.f32.mrf.mxu0
        %v803 = vadd.f32 0.0, %v802
        %804 = vdwg.mxu0
        %805 = vrot.lane.b32.xlu0 %v304, 64
        %v806 = vpop.permute.xlu0 %805
        %807 = vrot.lane.b32.xlu0 %v384, 64
        %v808 = vpop.permute.xlu0 %807
        %v809 = vsel %vm486, %v806, 0
        %v811 = vsel %vm486, %v808, 0
        %813 = vmatpush.xpose.msra.mxu0 0.0
        %814 = vmatpush.xpose.msra.mxu0 0.0
        %815 = vmatpush.xpose.msra.mxu0 0.0
        %816 = vmatpush.xpose.msra.mxu0 0.0
        %817 = vmatpush.xpose.msra.mxu0 0.0
        %818 = vmatpush.xpose.msra.mxu0 0.0
        %819 = vmatpush.xpose.msra.mxu0 0.0
        %820 = vmatpush.xpose.msra.mxu0 0.0
        %821 = vmatpush.xpose.msra.mxu0 0.0
        %822 = vmatpush.xpose.msra.mxu0 0.0
        %823 = vmatpush.xpose.msra.mxu0 0.0
        %824 = vmatpush.xpose.msra.mxu0 0.0
        %825 = vmatpush.xpose.msra.mxu0 0.0
        %826 = vmatpush.xpose.msra.mxu0 0.0
        %827 = vmatpush.xpose.msra.mxu0 0.0
        %828 = vmatpush.xpose.msra.mxu0 %v811
        %829 = vmatmul.f32.gmra.mxu0 %v809
        %v830 = vpop.f32.mrf.mxu0
        %v831 = vadd.f32 0.0, %v830
        %832 = vdwg.mxu0
        %v833 = vmul.f32 %v831, 0.125
        %v834 = vsel %vm514, %v833, -inf
        %835 = vmax.xlane.f32.xlu0 %v834
        %v836 = vpop.xlane.xlu0 %835
        %v837 = vsub.f32 %v833, %v836
        %v838 = vmul.f32 %v837, 1.442695
        %v839 = vpow.pop %v838
        %v840 = vsel %vm514, %v839, 0.0
        %841 = vadd.xlane.f32.xlu0 %v840
        %v842 = vpop.xlane.xlu0 %841
        %v843 = vrcp.pop %v842
        %v844 = vmul.f32 %v839, %v843
        %846 = vrot.lane.b32.xlu0 %v464, 64
        %v847 = vpop.permute.xlu0 %846
        %v850 = vsel %vm514, %v844, 0
        %852 = vmatpush.msra.mxu0 0.0
        %853 = vmatpush.msra.mxu0 0.0
        %854 = vmatpush.msra.mxu0 0.0
        %855 = vmatpush.msra.mxu0 0.0
        %856 = vmatpush.msra.mxu0 0.0
        %857 = vmatpush.msra.mxu0 0.0
        %858 = vmatpush.msra.mxu0 0.0
        %859 = vmatpush.msra.mxu0 0.0
        %860 = vmatpush.msra.mxu0 0.0
        %861 = vmatpush.msra.mxu0 0.0
        %862 = vmatpush.msra.mxu0 0.0
        %863 = vmatpush.msra.mxu0 0.0
        %864 = vmatpush.msra.mxu0 0.0
        %865 = vmatpush.msra.mxu0 0.0
        %866 = vmatpush.msra.mxu0 0.0
        %867 = vmatpush.msra.mxu0 %v847
        %868 = vmatmul.f32.gmra.mxu0 %v850
        %v869 = vpop.f32.mrf.mxu0
        %v870 = vadd.f32 0.0, %v869
        %871 = vdwg.mxu0
        %v873 = vsel %vm486, %v324, 0
        %v876 = vsel %vm486, %v404, 0
        %878 = vmatpush.xpose.msra.mxu0 0.0
        %879 = vmatpush.xpose.msra.mxu0 0.0
        %880 = vmatpush.xpose.msra.mxu0 0.0
        %881 = vmatpush.xpose.msra.mxu0 0.0
        %882 = vmatpush.xpose.msra.mxu0 0.0
        %883 = vmatpush.xpose.msra.mxu0 0.0
        %884 = vmatpush.xpose.msra.mxu0 0.0
        %885 = vmatpush.xpose.msra.mxu0 0.0
        %886 = vmatpush.xpose.msra.mxu0 0.0
        %887 = vmatpush.xpose.msra.mxu0 0.0
        %888 = vmatpush.xpose.msra.mxu0 0.0
        %889 = vmatpush.xpose.msra.mxu0 0.0
        %890 = vmatpush.xpose.msra.mxu0 0.0
        %891 = vmatpush.xpose.msra.mxu0 0.0
        %892 = vmatpush.xpose.msra.mxu0 0.0
        %893 = vmatpush.xpose.msra.mxu0 %v876
        %894 = vmatmul.f32.gmra.mxu0 %v873
        %v895 = vpop.f32.mrf.mxu0
        %v896 = vadd.f32 0.0, %v895
        %897 = vdwg.mxu0
        %v898 = vmul.f32 %v896, 0.125
        %v899 = vsel %vm514, %v898, -inf
        %900 = vmax.xlane.f32.xlu0 %v899
        %v901 = vpop.xlane.xlu0 %900
        %v902 = vsub.f32 %v898, %v901
        %v903 = vmul.f32 %v902, 1.442695
        %v904 = vpow.pop %v903
        %v905 = vsel %vm514, %v904, 0.0
        %906 = vadd.xlane.f32.xlu0 %v905
        %v907 = vpop.xlane.xlu0 %906
        %v908 = vrcp.pop %v907
        %v909 = vmul.f32 %v904, %v908
        %v911 = vsel %vm514, %v909, 0
        %913 = vmatpush.msra.mxu0 0.0
        %914 = vmatpush.msra.mxu0 0.0
        %915 = vmatpush.msra.mxu0 0.0
        %916 = vmatpush.msra.mxu0 0.0
        %917 = vmatpush.msra.mxu0 0.0
        %918 = vmatpush.msra.mxu0 0.0
        %919 = vmatpush.msra.mxu0 0.0
        %920 = vmatpush.msra.mxu0 0.0
        %921 = vmatpush.msra.mxu0 0.0
        %922 = vmatpush.msra.mxu0 0.0
        %923 = vmatpush.msra.mxu0 0.0
        %924 = vmatpush.msra.mxu0 0.0
        %925 = vmatpush.msra.mxu0 0.0
        %926 = vmatpush.msra.mxu0 0.0
        %927 = vmatpush.msra.mxu0 0.0
        %928 = vmatpush.msra.mxu0 %v484
        %929 = vmatmul.f32.gmra.mxu0 %v911
        %v930 = vpop.f32.mrf.mxu0
        %v931 = vadd.f32 0.0, %v930
        %932 = vdwg.mxu0
        %933 = vrot.lane.b32.xlu0 %v324, 64
        %v934 = vpop.permute.xlu0 %933
        %935 = vrot.lane.b32.xlu0 %v404, 64
        %v936 = vpop.permute.xlu0 %935
        %v937 = vsel %vm486, %v934, 0
        %v939 = vsel %vm486, %v936, 0
        %941 = vmatpush.xpose.msra.mxu0 0.0
        %942 = vmatpush.xpose.msra.mxu0 0.0
        %943 = vmatpush.xpose.msra.mxu0 0.0
        %944 = vmatpush.xpose.msra.mxu0 0.0
        %945 = vmatpush.xpose.msra.mxu0 0.0
        %946 = vmatpush.xpose.msra.mxu0 0.0
        %947 = vmatpush.xpose.msra.mxu0 0.0
        %948 = vmatpush.xpose.msra.mxu0 0.0
        %949 = vmatpush.xpose.msra.mxu0 0.0
        %950 = vmatpush.xpose.msra.mxu0 0.0
        %951 = vmatpush.xpose.msra.mxu0 0.0
        %952 = vmatpush.xpose.msra.mxu0 0.0
        %953 = vmatpush.xpose.msra.mxu0 0.0
        %954 = vmatpush.xpose.msra.mxu0 0.0
        %955 = vmatpush.xpose.msra.mxu0 0.0
        %956 = vmatpush.xpose.msra.mxu0 %v939
        %957 = vmatmul.f32.gmra.mxu0 %v937
        %v958 = vpop.f32.mrf.mxu0
        %v959 = vadd.f32 0.0, %v958
        %960 = vdwg.mxu0
        %v961 = vmul.f32 %v959, 0.125
        %v962 = vsel %vm514, %v961, -inf
        %963 = vmax.xlane.f32.xlu0 %v962
        %v964 = vpop.xlane.xlu0 %963
        %v965 = vsub.f32 %v961, %v964
        %v966 = vmul.f32 %v965, 1.442695
        %v967 = vpow.pop %v966
        %v968 = vsel %vm514, %v967, 0.0
        %969 = vadd.xlane.f32.xlu0 %v968
        %v970 = vpop.xlane.xlu0 %969
        %v971 = vrcp.pop %v970
        %v972 = vmul.f32 %v967, %v971
        %974 = vrot.lane.b32.xlu0 %v484, 64
        %v975 = vpop.permute.xlu0 %974
        %v978 = vsel %vm514, %v972, 0
        %980 = vmatpush.msra.mxu0 0.0
        %981 = vmatpush.msra.mxu0 0.0
        %982 = vmatpush.msra.mxu0 0.0
        %983 = vmatpush.msra.mxu0 0.0
        %984 = vmatpush.msra.mxu0 0.0
        %985 = vmatpush.msra.mxu0 0.0
        %986 = vmatpush.msra.mxu0 0.0
        %987 = vmatpush.msra.mxu0 0.0
        %988 = vmatpush.msra.mxu0 0.0
        %989 = vmatpush.msra.mxu0 0.0
        %990 = vmatpush.msra.mxu0 0.0
        %991 = vmatpush.msra.mxu0 0.0
        %992 = vmatpush.msra.mxu0 0.0
        %993 = vmatpush.msra.mxu0 0.0
        %994 = vmatpush.msra.mxu0 0.0
        %995 = vmatpush.msra.mxu0 %v975
        %996 = vmatmul.f32.gmra.mxu0 %v978
        %v997 = vpop.f32.mrf.mxu0
        %v998 = vadd.f32 0.0, %v997
        %999 = vdwg.mxu0
        %1001 = vrot.lane.b32.xlu0 %v614, 64
        %v1002 = vpop.permute.xlu0 %1001
        %1005 = vrot.lane.b32.xlu0 %v742, 64
        %v1006 = vpop.permute.xlu0 %1005
        %1009 = vrot.lane.b32.xlu0 %v870, 64
        %v1010 = vpop.permute.xlu0 %1009
        %1013 = vrot.lane.b32.xlu0 %v998, 64
        %v1014 = vpop.permute.xlu0 %1013
        %v1016 = vsel %vm486, %v547, %v1002
        %v1017 = vsel %vm486, %v675, %v1006
        %v1018 = vsel %vm486, %v803, %v1010
        %v1019 = vsel %vm486, %v931, %v1014
        %v1020 = vld [vmem:[%s2] sm:$0xff]
        %v1021 = vld [vmem:[%s2 + $0x8] sm:$0xff]
        %v1022 = vld [vmem:[%s2 + $0x10] sm:$0xff]
        %v1023 = vld [vmem:[%s2 + $0x18] sm:$0xff]
        %v1024 = vld [vmem:[%s2 + $0x20] sm:$0xff]
        %v1025 = vld [vmem:[%s2 + $0x28] sm:$0xff]
        %v1026 = vld [vmem:[%s2 + $0x30] sm:$0xff]
        %v1027 = vld [vmem:[%s2 + $0x38] sm:$0xff]
        %v1028 = vld [vmem:[%s2 + $0x40] sm:$0xff]
        %v1029 = vld [vmem:[%s2 + $0x48] sm:$0xff]
        %v1030 = vld [vmem:[%s2 + $0x50] sm:$0xff]
        %v1031 = vld [vmem:[%s2 + $0x58] sm:$0xff]
        %v1032 = vld [vmem:[%s2 + $0x60] sm:$0xff]
        %v1033 = vld [vmem:[%s2 + $0x68] sm:$0xff]
        %v1034 = vld [vmem:[%s2 + $0x70] sm:$0xff]
        %v1035 = vld [vmem:[%s2 + $0x78] sm:$0xff]
        %v1036 = vld [vmem:[%s2 + $0x80] sm:$0xff]
        %v1037 = vld [vmem:[%s2 + $0x88] sm:$0xff]
        %v1038 = vld [vmem:[%s2 + $0x90] sm:$0xff]
        %v1039 = vld [vmem:[%s2 + $0x98] sm:$0xff]
        %v1040 = vld [vmem:[%s2 + $0xa0] sm:$0xff]
        %v1041 = vld [vmem:[%s2 + $0xa8] sm:$0xff]
        %v1042 = vld [vmem:[%s2 + $0xb0] sm:$0xff]
        %v1043 = vld [vmem:[%s2 + $0xb8] sm:$0xff]
        %v1044 = vld [vmem:[%s2 + $0xc0] sm:$0xff]
        %v1045 = vld [vmem:[%s2 + $0xc8] sm:$0xff]
        %v1046 = vld [vmem:[%s2 + $0xd0] sm:$0xff]
        %v1047 = vld [vmem:[%s2 + $0xd8] sm:$0xff]
        %v1048 = vld [vmem:[%s2 + $0xe0] sm:$0xff]
        %v1049 = vld [vmem:[%s2 + $0xe8] sm:$0xff]
        %v1050 = vld [vmem:[%s2 + $0xf0] sm:$0xff]
        %v1051 = vld [vmem:[%s2 + $0xf8] sm:$0xff]
        %v1052 = vld [vmem:[%s2 + $0x100] sm:$0xff]
        %v1053 = vld [vmem:[%s2 + $0x108] sm:$0xff]
        %v1054 = vld [vmem:[%s2 + $0x110] sm:$0xff]
        %v1055 = vld [vmem:[%s2 + $0x118] sm:$0xff]
        %v1056 = vld [vmem:[%s2 + $0x120] sm:$0xff]
        %v1057 = vld [vmem:[%s2 + $0x128] sm:$0xff]
        %v1058 = vld [vmem:[%s2 + $0x130] sm:$0xff]
        %v1059 = vld [vmem:[%s2 + $0x138] sm:$0xff]
        %v1060 = vld [vmem:[%s2 + $0x140] sm:$0xff]
        %v1061 = vld [vmem:[%s2 + $0x148] sm:$0xff]
        %v1062 = vld [vmem:[%s2 + $0x150] sm:$0xff]
        %v1063 = vld [vmem:[%s2 + $0x158] sm:$0xff]
        %v1064 = vld [vmem:[%s2 + $0x160] sm:$0xff]
        %v1065 = vld [vmem:[%s2 + $0x168] sm:$0xff]
        %v1066 = vld [vmem:[%s2 + $0x170] sm:$0xff]
        %v1067 = vld [vmem:[%s2 + $0x178] sm:$0xff]
        %v1068 = vld [vmem:[%s2 + $0x180] sm:$0xff]
        %v1069 = vld [vmem:[%s2 + $0x188] sm:$0xff]
        %v1070 = vld [vmem:[%s2 + $0x190] sm:$0xff]
        %v1071 = vld [vmem:[%s2 + $0x198] sm:$0xff]
        %v1072 = vld [vmem:[%s2 + $0x1a0] sm:$0xff]
        %v1073 = vld [vmem:[%s2 + $0x1a8] sm:$0xff]
        %v1074 = vld [vmem:[%s2 + $0x1b0] sm:$0xff]
        %v1075 = vld [vmem:[%s2 + $0x1b8] sm:$0xff]
        %v1076 = vld [vmem:[%s2 + $0x1c0] sm:$0xff]
        %v1077 = vld [vmem:[%s2 + $0x1c8] sm:$0xff]
        %v1078 = vld [vmem:[%s2 + $0x1d0] sm:$0xff]
        %v1079 = vld [vmem:[%s2 + $0x1d8] sm:$0xff]
        %v1080 = vld [vmem:[%s2 + $0x1e0] sm:$0xff]
        %v1081 = vld [vmem:[%s2 + $0x1e8] sm:$0xff]
        %v1082 = vld [vmem:[%s2 + $0x1f0] sm:$0xff]
        %v1083 = vld [vmem:[%s2 + $0x1f8] sm:$0xff]
        %v1084 = vld [vmem:[%s3] sm:$0x1]
        %v1086 = vperm.slane %v1084, 0
        %1088 = vmatpush.msra.mxu0 %v1035
        %1089 = vmatpush.msra.mxu0 %v1034
        %1090 = vmatpush.msra.mxu0 %v1033
        %1091 = vmatpush.msra.mxu0 %v1032
        %1092 = vmatpush.msra.mxu0 %v1031
        %1093 = vmatpush.msra.mxu0 %v1030
        %1094 = vmatpush.msra.mxu0 %v1029
        %1095 = vmatpush.msra.mxu0 %v1028
        %1096 = vmatpush.msra.mxu0 %v1027
        %1097 = vmatpush.msra.mxu0 %v1026
        %1098 = vmatpush.msra.mxu0 %v1025
        %1099 = vmatpush.msra.mxu0 %v1024
        %1100 = vmatpush.msra.mxu0 %v1023
        %1101 = vmatpush.msra.mxu0 %v1022
        %1102 = vmatpush.msra.mxu0 %v1021
        %1103 = vmatpush.msra.mxu0 %v1020
        %1104 = vmatmul.f32.gmra.mxu0 %v1016
        %v1105 = vpop.f32.mrf.mxu0
        %v1106 = vadd.f32 %v1086, %v1105
        %1107 = vdwg.mxu0
        %1108 = vmatpush.msra.mxu0 %v1051
        %1109 = vmatpush.msra.mxu0 %v1050
        %1110 = vmatpush.msra.mxu0 %v1049
        %1111 = vmatpush.msra.mxu0 %v1048
        %1112 = vmatpush.msra.mxu0 %v1047
        %1113 = vmatpush.msra.mxu0 %v1046
        %1114 = vmatpush.msra.mxu0 %v1045
        %1115 = vmatpush.msra.mxu0 %v1044
        %1116 = vmatpush.msra.mxu0 %v1043
        %1117 = vmatpush.msra.mxu0 %v1042
        %1118 = vmatpush.msra.mxu0 %v1041
        %1119 = vmatpush.msra.mxu0 %v1040
        %1120 = vmatpush.msra.mxu0 %v1039
        %1121 = vmatpush.msra.mxu0 %v1038
        %1122 = vmatpush.msra.mxu0 %v1037
        %1123 = vmatpush.msra.mxu0 %v1036
        %1124 = vmatmul.f32.gmra.mxu0 %v1017
        %v1125 = vpop.f32.mrf.mxu0
        %v1126 = vadd.f32 %v1106, %v1125
        %1127 = vdwg.mxu0
        %1128 = vmatpush.msra.mxu0 %v1067
        %1129 = vmatpush.msra.mxu0 %v1066
        %1130 = vmatpush.msra.mxu0 %v1065
        %1131 = vmatpush.msra.mxu0 %v1064
        %1132 = vmatpush.msra.mxu0 %v1063
        %1133 = vmatpush.msra.mxu0 %v1062
        %1134 = vmatpush.msra.mxu0 %v1061
        %1135 = vmatpush.msra.mxu0 %v1060
        %1136 = vmatpush.msra.mxu0 %v1059
        %1137 = vmatpush.msra.mxu0 %v1058
        %1138 = vmatpush.msra.mxu0 %v1057
        %1139 = vmatpush.msra.mxu0 %v1056
        %1140 = vmatpush.msra.mxu0 %v1055
        %1141 = vmatpush.msra.mxu0 %v1054
        %1142 = vmatpush.msra.mxu0 %v1053
        %1143 = vmatpush.msra.mxu0 %v1052
        %1144 = vmatmul.f32.gmra.mxu0 %v1018
        %v1145 = vpop.f32.mrf.mxu0
        %v1146 = vadd.f32 %v1126, %v1145
        %1147 = vdwg.mxu0
        %1148 = vmatpush.msra.mxu0 %v1083
        %1149 = vmatpush.msra.mxu0 %v1082
        %1150 = vmatpush.msra.mxu0 %v1081
        %1151 = vmatpush.msra.mxu0 %v1080
        %1152 = vmatpush.msra.mxu0 %v1079
        %1153 = vmatpush.msra.mxu0 %v1078
        %1154 = vmatpush.msra.mxu0 %v1077
        %1155 = vmatpush.msra.mxu0 %v1076
        %1156 = vmatpush.msra.mxu0 %v1075
        %1157 = vmatpush.msra.mxu0 %v1074
        %1158 = vmatpush.msra.mxu0 %v1073
        %1159 = vmatpush.msra.mxu0 %v1072
        %1160 = vmatpush.msra.mxu0 %v1071
        %1161 = vmatpush.msra.mxu0 %v1070
        %1162 = vmatpush.msra.mxu0 %v1069
        %1163 = vmatpush.msra.mxu0 %v1068
        %1164 = vmatmul.f32.gmra.mxu0 %v1019
        %v1165 = vpop.f32.mrf.mxu0
        %v1166 = vadd.f32 %v1146, %v1165
        %1167 = vdwg.mxu0
        %1168 = vst.msk [vmem:[%s188] sm:$0xff] %vm242, %v1166
        %s1169 = sand.u32 %s115, 1
        %s1170 = scalar_lea.sflag [#allocation3], %s1169
        %s1171 = sand.u32 %s115, 1
        %s1172 = smul.addr %s1171, 8
        %s1173 = scalar_lea.vmem [#allocation2], %s1172
        // Predicated region
        $region37: #{tpu_custom_call.1} parent=35 // pred_check
          %p1174 = pneg %p125
        $region38: #{tpu_custom_call.1} parent=35 // pred_check_branch
          %1176 = sbr.rel (%p1174) target = $region40
        $region39: #{tpu_custom_call.1} parent=35 // pred_region
          %1178 = vsyncadd %s1170, 0
          %s1179 = smul.addr %s18, 8
          %s1180 = scalar_lea.hbm %s4, %s1179
          %s1182 = sshll.u32 %s1173, 4
          %s1183 = int_to_ptr.vmem [resolvable:$true] %s1182
          %s1184 = sshll.u32 %s1180, 4
          %s1185 = int_to_ptr.hbm [resolvable:$true] %s1184
          %1187 = dma.vmem_to_hbm [thread:$0]  %s1183, 128, %s1185, %s1170
        $region40: #{tpu_custom_call.1} parent=35 // pred_fallthru
          _
      $region36: #{tpu_custom_call.1} parent=5 // pred_fallthru
        _
      %p1188 = scmp.le.s32.totalorder 2, %s13
      // Predicated region
      $region41: #{tpu_custom_call.1} parent=5 // pred_check
        %p1189 = pneg %p1188
      $region42: #{tpu_custom_call.1} parent=5 // pred_check_branch
        %1191 = sbr.rel (%p1189) target = $region44
      $region43: #{tpu_custom_call.1} parent=5 // pred_region
        %s1192 = ssub.s32 %s13, 2
        // Predicated region
        $region45: #{tpu_custom_call.1} parent=43 // pred_check
          %p1193 = pneg %p131
        $region46: #{tpu_custom_call.1} parent=43 // pred_check_branch
          %1195 = sbr.rel (%p1193) target = $region48
        $region47: #{tpu_custom_call.1} parent=43 // pred_region
          %s1196 = sand.u32 %s116, 1
          %s1197 = scalar_lea.sflag [#allocation3], %s1196
          %s1198 = sand.u32 %s116, 1
          %s1199 = smul.addr %s1198, 8
          %s1200 = scalar_lea.vmem [#allocation2], %s1199
          %1202 = dma.done %s1197, 128
        $region48: #{tpu_custom_call.1} parent=43 // pred_fallthru
          _
      $region44: #{tpu_custom_call.1} parent=5 // pred_fallthru
        _
    $region6: #{tpu_custom_call.1} parent=1 // loop_footer
      %s17 = sadd.s32 1, %s13
    $region7: #{tpu_custom_call.1} parent=1 // loop_footer_branch
      %12 = sbr.rel target = $region3
    $region8: #{tpu_custom_call.1} parent=1 // loop_exit
      _
    %1203 = vsyncpa [#allocation3], 1
    %s1204 = scalar_lea.sflag [#allocation3], 1
    %1205 = vsyncpa %s1204, 1

</llo_original>
